<compile_context>
chip_gen: v7x
topology: tpu7x:2x2x1
jax: 0.10.0
libtpu: 0.0.40
codegen_flags: <defaults>
</compile_context>

<pallas_src>
import functools

import jax
import jax.numpy as jnp
from jax.experimental import pallas as pl
from jax.experimental.pallas import tpu as pltpu


# ---- fused parameter slab layout (all offsets 16-aligned for bf16 packing) ----
_IN = 784        # input features
_H = 512         # padded hidden width (500 -> 512)
_C = 128         # padded class width (10 -> 128)
_R_W1 = 0        # rows 0:784      -> w1 (784, 512)
_R_W2 = 784      # rows 784:1296   -> w2 (512, 512)
_R_W3 = 1296     # rows 1296:1808  -> w3 (512, 512); only lanes 0:128 used
_R_B = 1808      # rows 1808..1810 -> b1, b2, b3 (b3 pad lanes = -1e30 mask)
_SLAB_ROWS = 1824  # padded to a multiple of 16


def _round_up(n, m):
    return ((n + m - 1) // m) * m


def _mlp_kernel(x_ref, slab_ref, o_ref):
    """Fused MLP (bf16 MXU operands, f32 accumulation) + masked log_softmax.

    Grid is over batch tiles; the parameter slab uses a constant index_map so it
    is DMA'd once and stays resident in VMEM across the whole grid.
    """
    # In-kernel f32 -> bf16 cast of the streamed x tile (free VPU cast).
    x = x_ref[...].astype(jnp.bfloat16)                          # (tb, 784)

    # Zero-cost static views into the fused parameter slab.
    w1 = slab_ref[_R_W1:_R_W1 + _IN, :]                          # (784, 512) bf16
    w2 = slab_ref[_R_W2:_R_W2 + _H, :]                           # (512, 512) bf16
    w3 = slab_ref[_R_W3:_R_W3 + _H, 0:_C]                        # (512, 128) bf16
    b1 = slab_ref[_R_B + 0:_R_B + 1, :].astype(jnp.float32)      # (1, 512)
    b2 = slab_ref[_R_B + 1:_R_B + 2, :].astype(jnp.float32)      # (1, 512)
    b3 = slab_ref[_R_B + 2:_R_B + 3, 0:_C].astype(jnp.float32)   # (1, 128); pad lanes = -1e30

    # Layer 1: Linear(784 -> 512pad) + ReLU   (bf16 x bf16 -> f32 acc)
    h1 = jnp.dot(x, w1, preferred_element_type=jnp.float32) + b1
    h1 = jnp.maximum(h1, 0.0)

    # Layer 2: Linear(512 -> 512pad) + ReLU
    h2 = jnp.dot(h1.astype(jnp.bfloat16), w2,
                 preferred_element_type=jnp.float32) + b2
    h2 = jnp.maximum(h2, 0.0)

    # Layer 3: Linear(512 -> 128pad).  Padded lanes get b3 = -1e30 (mask).
    logits = jnp.dot(h2.astype(jnp.bfloat16), w3,
                     preferred_element_type=jnp.float32) + b3

    # Stable log_softmax over the (padded) class dimension, all f32.
    # Pad lanes are ~-1e30 -> exp underflows to 0, so they don't affect the sum.
    m = jnp.max(logits, axis=1, keepdims=True)
    shifted = logits - m
    lse = jnp.log(jnp.sum(jnp.exp(shifted), axis=1, keepdims=True))
    o_ref[...] = (shifted - lse).astype(o_ref.dtype)


def prepare_params(params_f32):
    """One-time param prep: pad everything to lane-aligned shapes and fuse into
    a single bf16 slab of shape (_SLAB_ROWS, 512)."""
    w1, b1, w2, b2, w3, b3 = params_f32
    slab = jnp.zeros((_SLAB_ROWS, _H), jnp.float32)
    slab = slab.at[_R_W1:_R_W1 + 784, 0:500].set(w1)
    slab = slab.at[_R_W2:_R_W2 + 500, 0:500].set(w2)
    slab = slab.at[_R_W3:_R_W3 + 500, 0:10].set(w3)
    slab = slab.at[_R_B + 0, 0:500].set(b1.reshape(-1))
    slab = slab.at[_R_B + 1, 0:500].set(b2.reshape(-1))
    # b3 row: real bias in lanes 0:10, -1e30 in lanes 10:128 so padded logit
    # lanes are masked out of the log_softmax.
    b3_row = jnp.full((_C,), -1e30, jnp.float32).at[0:10].set(b3.reshape(-1))
    slab = slab.at[_R_B + 2, 0:_C].set(b3_row)
    return slab.astype(jnp.bfloat16)


@functools.partial(jax.jit, static_argnames=("length",))
def baseline_ann_forward(x, param_slab, *, length):
    """x: [batch, 784] f32 -> [batch, 10, length] (log-probs expanded along time)."""
    batch = x.shape[0]

    # Batch tiling: TB rows per grid step (sublane-aligned).  The slab stays
    # resident (constant index_map), x/out tiles stream and double-buffer.
    TB_TARGET = 512
    padded8 = _round_up(batch, 8)
    tb = min(TB_TARGET, padded8)
    padded_batch = _round_up(batch, tb)
    grid = (padded_batch // tb,)

    if padded_batch != batch:
        x = jnp.pad(x, ((0, padded_batch - batch), (0, 0)))

    log_probs = pl.pallas_call(
        _mlp_kernel,
        out_shape=jax.ShapeDtypeStruct((padded_batch, _C), jnp.float32),
        grid_spec=pltpu.PrefetchScalarGridSpec(
            num_scalar_prefetch=0,
            grid=grid,
            in_specs=[
                pl.BlockSpec((tb, _IN), lambda i: (i, 0)),          # x tile (streams, f32)
                pl.BlockSpec((_SLAB_ROWS, _H), lambda i: (0, 0)),    # fused params (resident)
            ],
            out_specs=pl.BlockSpec((tb, _C), lambda i: (i, 0)),      # lane-dense output
        ),
        compiler_params=pltpu.CompilerParams(
            # Multi-tile regime: shard batch tiles across TensorCores (v7x
            # megacore); single-tile small batch is weight-DMA bound, so keep
            # it on one core to avoid duplicating the weight traffic.
            dimension_semantics=("parallel",) if grid[0] > 1 else ("arbitrary",),
            vmem_limit_bytes=32 * 1024 * 1024,
        ),
    )(x, param_slab)

    log_probs = log_probs[:batch, :10]

    # utils.expand_along_time: repeat [batch, 10] along a trailing time axis.
    coding_out = jnp.broadcast_to(log_probs[:, :, None], (batch, 10, length))
    return coding_out


def _init_linear(key, fan_in, fan_out):
    """Deterministic init mimicking torch.nn.Linear default (U[-1/sqrt(fan_in), +...])."""
    kw, kb = jax.random.split(key)
    bound = 1.0 / jnp.sqrt(jnp.float32(fan_in))
    # Stored transposed relative to PyTorch: shape (fan_in, fan_out) for x @ W.
    w = jax.random.uniform(kw, (fan_in, fan_out), jnp.float32, -bound, bound)
    b = jax.random.uniform(kb, (fan_out,), jnp.float32, -bound, bound)
    return w, b


def _reference_forward(x, params_f32, length):
    """Pure-JAX f32 reference for validation."""
    w1, b1, w2, b2, w3, b3 = params_f32
    h1 = jnp.maximum(x @ w1 + b1, 0.0)
    h2 = jnp.maximum(h1 @ w2 + b2, 0.0)
    logits = h2 @ w3 + b3
    lp = jax.nn.log_softmax(logits, axis=1)
    return jnp.broadcast_to(lp[:, :, None], (x.shape[0], 10, length))


if __name__ == "__main__":
    key = jax.random.PRNGKey(0)
    k_x, k1, k2, k3 = jax.random.split(key, 4)

    batch = 8
    length = 8  # time-expansion length

    # Deterministic parameters (module __init__: 784->500, 500->500, 500->10)
    w1, b1 = _init_linear(k1, 784, 500)
    w2, b2 = _init_linear(k2, 500, 500)
    w3, b3 = _init_linear(k3, 500, 10)
    params_f32 = (w1, b1, w2, b2, w3, b3)
    param_slab = prepare_params(params_f32)

    # Deterministic example input: flattened MNIST-like features [batch, 784]
    x = jax.random.normal(k_x, (batch, 784), jnp.float32)

    out = baseline_ann_forward(x, param_slab, length=length)
    out = jax.block_until_ready(out)

    assert out.shape == (batch, 10, length)

    # log_softmax sanity: each class-row sums (in prob space) to ~1
    probs_sum = jnp.exp(out[:, :, 0]).sum(axis=1)
    assert jnp.allclose(probs_sum, 1.0, atol=1e-3)

    # bf16-weight kernel vs f32 pure-JAX reference
    ref = _reference_forward(x, params_f32, length)
    assert jnp.allclose(out, ref, atol=1e-1), float(jnp.max(jnp.abs(out - ref)))

    print("KERNEL_OK")
</pallas_src>

<mosaic_0001>
module attributes {stable_mosaic.version = 11 : i64} {
  func.func @_mlp_kernel(%arg0: i32, %arg1: memref<8x784xf32, #tpu.memory_space<vmem>>, %arg2: memref<1824x512xbf16, #tpu.memory_space<vmem>>, %arg3: memref<8x128xf32, #tpu.memory_space<vmem>>) attributes {dimension_semantics = [#tpu.dimension_semantics<arbitrary>], iteration_bounds = array<i64: 1>, scalar_prefetch = 0 : i64, scratch_operands = 0 : i64, tpu.core_type = #tpu.core_type<tc>, window_params = [{transform_indices = @transform_0, window_bounds = array<i64: 8, 784>}, {pipeline_mode = #tpu.pipeline_mode<synchronous>, transform_indices = @transform_1, window_bounds = array<i64: 1824, 512>}, {transform_indices = @transform_2, window_bounds = array<i64: 8, 128>}]} {
    %c0 = arith.constant 0 : index
    %c0_0 = arith.constant 0 : index
    %0 = vector.load %arg1[%c0, %c0_0] : memref<8x784xf32, #tpu.memory_space<vmem>>, vector<8x784xf32>
    %1 = arith.truncf %0 : vector<8x784xf32> to vector<8x784xbf16>
    %c0_1 = arith.constant 0 : index
    %c0_2 = arith.constant 0 : index
    %2 = vector.load %arg2[%c0_1, %c0_2] : memref<1824x512xbf16, #tpu.memory_space<vmem>>, vector<784x512xbf16>
    %c784 = arith.constant 784 : index
    %c0_3 = arith.constant 0 : index
    %3 = vector.load %arg2[%c784, %c0_3] : memref<1824x512xbf16, #tpu.memory_space<vmem>>, vector<512x512xbf16>
    %c1296 = arith.constant 1296 : index
    %c0_4 = arith.constant 0 : index
    %4 = vector.load %arg2[%c1296, %c0_4] : memref<1824x512xbf16, #tpu.memory_space<vmem>>, vector<512x128xbf16>
    %c1808 = arith.constant 1808 : index
    %c0_5 = arith.constant 0 : index
    %5 = vector.load %arg2[%c1808, %c0_5] : memref<1824x512xbf16, #tpu.memory_space<vmem>>, vector<1x512xbf16>
    %6 = arith.extf %5 : vector<1x512xbf16> to vector<1x512xf32>
    %c1809 = arith.constant 1809 : index
    %c0_6 = arith.constant 0 : index
    %7 = vector.load %arg2[%c1809, %c0_6] : memref<1824x512xbf16, #tpu.memory_space<vmem>>, vector<1x512xbf16>
    %8 = arith.extf %7 : vector<1x512xbf16> to vector<1x512xf32>
    %c1810 = arith.constant 1810 : index
    %c0_7 = arith.constant 0 : index
    %9 = vector.load %arg2[%c1810, %c0_7] : memref<1824x512xbf16, #tpu.memory_space<vmem>>, vector<1x128xbf16>
    %10 = arith.extf %9 : vector<1x128xbf16> to vector<1x128xf32>
    %cst = arith.constant dense<0.000000e+00> : vector<8x512xf32>
    %11 = tpu.matmul %1, %2, %cst {dimension_numbers = #tpu.dot_dimension_numbers<[1], [0], [0], [1], [0, 0, 1, 1], [], []>} : vector<8x784xbf16>, vector<784x512xbf16>, vector<8x512xf32> -> vector<8x512xf32>
    %12 = vector.broadcast %6 : vector<1x512xf32> to vector<8x512xf32>
    %13 = arith.addf %11, %12 : vector<8x512xf32>
    %cst_8 = arith.constant 0.000000e+00 : f32
    %14 = vector.broadcast %cst_8 : f32 to vector<8x512xf32>
    %15 = arith.maximumf %13, %14 : vector<8x512xf32>
    %16 = arith.truncf %15 : vector<8x512xf32> to vector<8x512xbf16>
    %cst_9 = arith.constant dense<0.000000e+00> : vector<8x512xf32>
    %17 = tpu.matmul %16, %3, %cst_9 {dimension_numbers = #tpu.dot_dimension_numbers<[1], [0], [0], [1], [0, 0, 1, 1], [], []>} : vector<8x512xbf16>, vector<512x512xbf16>, vector<8x512xf32> -> vector<8x512xf32>
    %18 = vector.broadcast %8 : vector<1x512xf32> to vector<8x512xf32>
    %19 = arith.addf %17, %18 : vector<8x512xf32>
    %cst_10 = arith.constant 0.000000e+00 : f32
    %20 = vector.broadcast %cst_10 : f32 to vector<8x512xf32>
    %21 = arith.maximumf %19, %20 : vector<8x512xf32>
    %22 = arith.truncf %21 : vector<8x512xf32> to vector<8x512xbf16>
    %cst_11 = arith.constant dense<0.000000e+00> : vector<8x128xf32>
    %23 = tpu.matmul %22, %4, %cst_11 {dimension_numbers = #tpu.dot_dimension_numbers<[1], [0], [0], [1], [0, 0, 1, 1], [], []>} : vector<8x512xbf16>, vector<512x128xbf16>, vector<8x128xf32> -> vector<8x128xf32>
    %24 = vector.broadcast %10 : vector<1x128xf32> to vector<8x128xf32>
    %25 = arith.addf %23, %24 : vector<8x128xf32>
    %cst_12 = arith.constant dense<0xFF800000> : vector<8xf32>
    %26 = vector.multi_reduction <maximumf>, %25, %cst_12 [1] : vector<8x128xf32> to vector<8xf32>
    %27 = vector.shape_cast %26 : vector<8xf32> to vector<8x1xf32>
    %28 = vector.broadcast %27 : vector<8x1xf32> to vector<8x128xf32>
    %29 = arith.subf %25, %28 : vector<8x128xf32>
    %30 = math.exp %29 : vector<8x128xf32>
    %cst_13 = arith.constant dense<0.000000e+00> : vector<8xf32>
    %31 = vector.multi_reduction <add>, %30, %cst_13 [1] : vector<8x128xf32> to vector<8xf32>
    %32 = vector.shape_cast %31 : vector<8xf32> to vector<8x1xf32>
    %33 = math.log %32 : vector<8x1xf32>
    %34 = vector.broadcast %33 : vector<8x1xf32> to vector<8x128xf32>
    %35 = arith.subf %29, %34 : vector<8x128xf32>
    %c0_14 = arith.constant 0 : index
    %c0_15 = arith.constant 0 : index
    %36 = vector.load %arg3[%c0_14, %c0_15] : memref<8x128xf32, #tpu.memory_space<vmem>>, vector<8x128xf32>
    tpu.vector_store %arg3[%c0_14, %c0_15], %35 {strides = array<i32>} : memref<8x128xf32, #tpu.memory_space<vmem>>, vector<8x128xf32>,
    return
  }
  func.func @transform_0(%arg0: i32) -> (i32, i32) {
    %c0_i32 = arith.constant 0 : i32
    %c0_i32_0 = arith.constant 0 : i32
    return %arg0, %c0_i32 : i32, i32
  }
  func.func @transform_1(%arg0: i32) -> (i32, i32) {
    %c0_i32 = arith.constant 0 : i32
    %c0_i32_0 = arith.constant 0 : i32
    %c0_i32_1 = arith.constant 0 : i32
    return %c0_i32, %c0_i32_0 : i32, i32
  }
  func.func @transform_2(%arg0: i32) -> (i32, i32) {
    %c0_i32 = arith.constant 0 : i32
    %c0_i32_0 = arith.constant 0 : i32
    return %arg0, %c0_i32 : i32, i32
  }
}

</mosaic_0001>

<llo_original>
// kernel: baseline_ann_forward.1
$region0: #{baseline_ann_forward.1}
  #allocation0 [shape = 'u32[]', space=smem, size = 0x4, offset = 0x4, fixed_abs, tag = 'smem constant byte address 0x4 - core index']
  #allocation1 [shape = 'u32[144,128]{1,0:T(1,128)}', space=vmem, size = 0x12000, scoped, tag = 'internal scratch']
  %s0 = inlined_call_operand.hbm [shape: f32[8,784], index: 0, kind: input, shape index: {}]
  %s1 = inlined_call_operand.hbm [shape: bf16[1824,512], index: 1, kind: input, shape index: {}]
  %s2 = inlined_call_operand.vmem [shape: f32[8,128], index: 2, kind: output, shape index: {}]
  %s3 = sld [smem:[#allocation0]]
  $region26: #{baseline_ann_forward.1} parent=0
    _
  %s5 = ssub.s32 1, %s3
  %s6 = scalar_select 0, %s5, %s3
  $region1: #{baseline_ann_forward.1} parent=0
    #allocation2 [shape = 'u8[28672]{0}', space=vmem, size = 0x7000, scoped, tag = 'input window, operand 0, single buffered']
    #allocation3 [shape = 's32[1]{0}', space=sflag, size = 0x4, scoped, tag = 'scoped memory for baseline_ann_forward.1']
    #allocation4 [shape = 'u8[1867776]{0}', space=vmem, size = 0x1c8000, scoped, tag = 'input window, operand 1, single buffered']
    #allocation5 [shape = 's32[1]{0}', space=sflag, size = 0x4, scoped, tag = 'scoped memory for baseline_ann_forward.1']
    %7 = vsyncpa [#allocation3], 0
    %8 = vsyncpa [#allocation5], 0
    // Predicated region
    $region2: #{baseline_ann_forward.1} parent=1 // pred_check
      _
    $region3: #{baseline_ann_forward.1} parent=1 // pred_check_branch
      %10 = sbr.rel (0) target = $region5
    $region4: #{baseline_ann_forward.1} parent=1 // pred_region
      %s12 = ssub.s32 896, 896
      %13 = vsyncadd [#allocation3], %s12
      %s15 = sshll.u32 [#allocation2], 4
      %s16 = int_to_ptr.vmem [resolvable:$true] %s15
      %18 = dma.hbm_to_vmem [thread:$0]  %s0, 896, %s16, [#allocation3]
    $region5: #{baseline_ann_forward.1} parent=1 // pred_fallthru
      _
    // Predicated region
    $region6: #{baseline_ann_forward.1} parent=1 // pred_check
      _
    $region7: #{baseline_ann_forward.1} parent=1 // pred_check_branch
      %20 = sbr.rel (0) target = $region9
    $region8: #{baseline_ann_forward.1} parent=1 // pred_region
      %s22 = ssub.s32 58368, 58368
      %23 = vsyncadd [#allocation5], %s22
      %s24 = sshll.u32 [#allocation4], 4
      %s25 = int_to_ptr.vmem [resolvable:$true] %s24
      %30 = dma.hbm_to_vmem [thread:$0]  %s1, 58368, %s25, [#allocation5], 256, 256, 16
    $region9: #{baseline_ann_forward.1} parent=1 // pred_fallthru
      _
    // Predicated region
    $region10: #{baseline_ann_forward.1} parent=1 // pred_check
      _
    $region11: #{baseline_ann_forward.1} parent=1 // pred_check_branch
      %32 = sbr.rel (0) target = $region13
    $region12: #{baseline_ann_forward.1} parent=1 // pred_region
      %33 = dma.done [#allocation3], 896
    $region13: #{baseline_ann_forward.1} parent=1 // pred_fallthru
      _
    // Predicated region
    $region14: #{baseline_ann_forward.1} parent=1 // pred_check
      _
    $region15: #{baseline_ann_forward.1} parent=1 // pred_check_branch
      %35 = sbr.rel (0) target = $region17
    $region16: #{baseline_ann_forward.1} parent=1 // pred_region
      %36 = dma.done [#allocation5], 58368
    $region17: #{baseline_ann_forward.1} parent=1 // pred_fallthru
      _
    %v38 = vld [vmem:[#allocation2] sm:$0xff]
    %v39 = vld [vmem:[#allocation2 + $0x8] sm:$0xff]
    %v40 = vld [vmem:[#allocation2 + $0x10] sm:$0xff]
    %v41 = vld [vmem:[#allocation2 + $0x18] sm:$0xff]
    %v42 = vld [vmem:[#allocation2 + $0x20] sm:$0xff]
    %v43 = vld [vmem:[#allocation2 + $0x28] sm:$0xff]
    %v44 = vld [vmem:[#allocation2 + $0x30] sm:$0xff]
    %v45 = vpack.c.bf16 %v38, %v38
    %v46 = vpack.c.bf16 %v39, %v39
    %v47 = vpack.c.bf16 %v40, %v40
    %v48 = vpack.c.bf16 %v41, %v41
    %v49 = vpack.c.bf16 %v42, %v42
    %v50 = vpack.c.bf16 %v43, %v43
    %v51 = vpack.c.bf16 %v44, %v44
    %v52 = vld [vmem:[#allocation4] sm:$0xff]
    %v53 = vld [vmem:[#allocation4 + $0x8] sm:$0xff]
    %v54 = vld [vmem:[#allocation4 + $0x10] sm:$0xff]
    %v55 = vld [vmem:[#allocation4 + $0x18] sm:$0xff]
    %v56 = vld [vmem:[#allocation4 + $0x20] sm:$0xff]
    %v57 = vld [vmem:[#allocation4 + $0x28] sm:$0xff]
    %v58 = vld [vmem:[#allocation4 + $0x30] sm:$0xff]
    %v59 = vld [vmem:[#allocation4 + $0x38] sm:$0xff]
    %v60 = vld [vmem:[#allocation4 + $0x40] sm:$0xff]
    %v61 = vld [vmem:[#allocation4 + $0x48] sm:$0xff]
    %v62 = vld [vmem:[#allocation4 + $0x50] sm:$0xff]
    %v63 = vld [vmem:[#allocation4 + $0x58] sm:$0xff]
    %v64 = vld [vmem:[#allocation4 + $0x60] sm:$0xff]
    %v65 = vld [vmem:[#allocation4 + $0x68] sm:$0xff]
    %v66 = vld [vmem:[#allocation4 + $0x70] sm:$0xff]
    %v67 = vld [vmem:[#allocation4 + $0x78] sm:$0xff]
    %v68 = vld [vmem:[#allocation4 + $0x80] sm:$0xff]
    %v69 = vld [vmem:[#allocation4 + $0x88] sm:$0xff]
    %v70 = vld [vmem:[#allocation4 + $0x90] sm:$0xff]
    %v71 = vld [vmem:[#allocation4 + $0x98] sm:$0xff]
    %v72 = vld [vmem:[#allocation4 + $0xa0] sm:$0xff]
    %v73 = vld [vmem:[#allocation4 + $0xa8] sm:$0xff]
    %v74 = vld [vmem:[#allocation4 + $0xb0] sm:$0xff]
    %v75 = vld [vmem:[#allocation4 + $0xb8] sm:$0xff]
    %v76 = vld [vmem:[#allocation4 + $0xc0] sm:$0xff]
    %v77 = vld [vmem:[#allocation4 + $0xc8] sm:$0xff]
    %v78 = vld [vmem:[#allocation4 + $0xd0] sm:$0xff]
    %v79 = vld [vmem:[#allocation4 + $0xd8] sm:$0xff]
    %v80 = vld [vmem:[#allocation4 + $0xe0] sm:$0xff]
    %v81 = vld [vmem:[#allocation4 + $0xe8] sm:$0xff]
    %v82 = vld [vmem:[#allocation4 + $0xf0] sm:$0xff]
    %v83 = vld [vmem:[#allocation4 + $0xf8] sm:$0xff]
    %v84 = vld [vmem:[#allocation4 + $0x100] sm:$0xff]
    %v85 = vld [vmem:[#allocation4 + $0x108] sm:$0xff]
    %v86 = vld [vmem:[#allocation4 + $0x110] sm:$0xff]
    %v87 = vld [vmem:[#allocation4 + $0x118] sm:$0xff]
    %v88 = vld [vmem:[#allocation4 + $0x120] sm:$0xff]
    %v89 = vld [vmem:[#allocation4 + $0x128] sm:$0xff]
    %v90 = vld [vmem:[#allocation4 + $0x130] sm:$0xff]
    %v91 = vld [vmem:[#allocation4 + $0x138] sm:$0xff]
    %v92 = vld [vmem:[#allocation4 + $0x140] sm:$0xff]
    %v93 = vld [vmem:[#allocation4 + $0x148] sm:$0xff]
    %v94 = vld [vmem:[#allocation4 + $0x150] sm:$0xff]
    %v95 = vld [vmem:[#allocation4 + $0x158] sm:$0xff]
    %v96 = vld [vmem:[#allocation4 + $0x160] sm:$0xff]
    %v97 = vld [vmem:[#allocation4 + $0x168] sm:$0xff]
    %v98 = vld [vmem:[#allocation4 + $0x170] sm:$0xff]
    %v99 = vld [vmem:[#allocation4 + $0x178] sm:$0xff]
    %v100 = vld [vmem:[#allocation4 + $0x180] sm:$0xff]
    %v101 = vld [vmem:[#allocation4 + $0x188] sm:$0xff]
    %v102 = vld [vmem:[#allocation4 + $0x190] sm:$0xff]
    %v103 = vld [vmem:[#allocation4 + $0x198] sm:$0xff]
    %v104 = vld [vmem:[#allocation4 + $0x1a0] sm:$0xff]
    %v105 = vld [vmem:[#allocation4 + $0x1a8] sm:$0xff]
    %v106 = vld [vmem:[#allocation4 + $0x1b0] sm:$0xff]
    %v107 = vld [vmem:[#allocation4 + $0x1b8] sm:$0xff]
    %v108 = vld [vmem:[#allocation4 + $0x1c0] sm:$0xff]
    %v109 = vld [vmem:[#allocation4 + $0x1c8] sm:$0xff]
    %v110 = vld [vmem:[#allocation4 + $0x1d0] sm:$0xff]
    %v111 = vld [vmem:[#allocation4 + $0x1d8] sm:$0xff]
    %v112 = vld [vmem:[#allocation4 + $0x1e0] sm:$0xff]
    %v113 = vld [vmem:[#allocation4 + $0x1e8] sm:$0xff]
    %v114 = vld [vmem:[#allocation4 + $0x1f0] sm:$0xff]
    %v115 = vld [vmem:[#allocation4 + $0x1f8] sm:$0xff]
    %v116 = vld [vmem:[#allocation4 + $0x200] sm:$0xff]
    %v117 = vld [vmem:[#allocation4 + $0x208] sm:$0xff]
    %v118 = vld [vmem:[#allocation4 + $0x210] sm:$0xff]
    %v119 = vld [vmem:[#allocation4 + $0x218] sm:$0xff]
    %v120 = vld [vmem:[#allocation4 + $0x220] sm:$0xff]
    %v121 = vld [vmem:[#allocation4 + $0x228] sm:$0xff]
    %v122 = vld [vmem:[#allocation4 + $0x230] sm:$0xff]
    %v123 = vld [vmem:[#allocation4 + $0x238] sm:$0xff]
    %v124 = vld [vmem:[#allocation4 + $0x240] sm:$0xff]
    %v125 = vld [vmem:[#allocation4 + $0x248] sm:$0xff]
    %v126 = vld [vmem:[#allocation4 + $0x250] sm:$0xff]
    %v127 = vld [vmem:[#allocation4 + $0x258] sm:$0xff]
    %v128 = vld [vmem:[#allocation4 + $0x260] sm:$0xff]
    %v129 = vld [vmem:[#allocation4 + $0x268] sm:$0xff]
    %v130 = vld [vmem:[#allocation4 + $0x270] sm:$0xff]
    %v131 = vld [vmem:[#allocation4 + $0x278] sm:$0xff]
    %v132 = vld [vmem:[#allocation4 + $0x280] sm:$0xff]
    %v133 = vld [vmem:[#allocation4 + $0x288] sm:$0xff]
    %v134 = vld [vmem:[#allocation4 + $0x290] sm:$0xff]
    %v135 = vld [vmem:[#allocation4 + $0x298] sm:$0xff]
    %v136 = vld [vmem:[#allocation4 + $0x2a0] sm:$0xff]
    %v137 = vld [vmem:[#allocation4 + $0x2a8] sm:$0xff]
    %v138 = vld [vmem:[#allocation4 + $0x2b0] sm:$0xff]
    %v139 = vld [vmem:[#allocation4 + $0x2b8] sm:$0xff]
    %v140 = vld [vmem:[#allocation4 + $0x2c0] sm:$0xff]
    %v141 = vld [vmem:[#allocation4 + $0x2c8] sm:$0xff]
    %v142 = vld [vmem:[#allocation4 + $0x2d0] sm:$0xff]
    %v143 = vld [vmem:[#allocation4 + $0x2d8] sm:$0xff]
    %v144 = vld [vmem:[#allocation4 + $0x2e0] sm:$0xff]
    %v145 = vld [vmem:[#allocation4 + $0x2e8] sm:$0xff]
    %v146 = vld [vmem:[#allocation4 + $0x2f0] sm:$0xff]
    %v147 = vld [vmem:[#allocation4 + $0x2f8] sm:$0xff]
    %v148 = vld [vmem:[#allocation4 + $0x300] sm:$0xff]
    %v149 = vld [vmem:[#allocation4 + $0x308] sm:$0xff]
    %v150 = vld [vmem:[#allocation4 + $0x310] sm:$0xff]
    %v151 = vld [vmem:[#allocation4 + $0x318] sm:$0xff]
    %v152 = vld [vmem:[#allocation4 + $0x320] sm:$0xff]
    %v153 = vld [vmem:[#allocation4 + $0x328] sm:$0xff]
    %v154 = vld [vmem:[#allocation4 + $0x330] sm:$0xff]
    %v155 = vld [vmem:[#allocation4 + $0x338] sm:$0xff]
    %v156 = vld [vmem:[#allocation4 + $0x340] sm:$0xff]
    %v157 = vld [vmem:[#allocation4 + $0x348] sm:$0xff]
    %v158 = vld [vmem:[#allocation4 + $0x350] sm:$0xff]
    %v159 = vld [vmem:[#allocation4 + $0x358] sm:$0xff]
    %v160 = vld [vmem:[#allocation4 + $0x360] sm:$0xff]
    %v161 = vld [vmem:[#allocation4 + $0x368] sm:$0xff]
    %v162 = vld [vmem:[#allocation4 + $0x370] sm:$0xff]
    %v163 = vld [vmem:[#allocation4 + $0x378] sm:$0xff]
    %v164 = vld [vmem:[#allocation4 + $0x380] sm:$0xff]
    %v165 = vld [vmem:[#allocation4 + $0x388] sm:$0xff]
    %v166 = vld [vmem:[#allocation4 + $0x390] sm:$0xff]
    %v167 = vld [vmem:[#allocation4 + $0x398] sm:$0xff]
    %v168 = vld [vmem:[#allocation4 + $0x3a0] sm:$0xff]
    %v169 = vld [vmem:[#allocation4 + $0x3a8] sm:$0xff]
    %v170 = vld [vmem:[#allocation4 + $0x3b0] sm:$0xff]
    %v171 = vld [vmem:[#allocation4 + $0x3b8] sm:$0xff]
    %v172 = vld [vmem:[#allocation4 + $0x3c0] sm:$0xff]
    %v173 = vld [vmem:[#allocation4 + $0x3c8] sm:$0xff]
    %v174 = vld [vmem:[#allocation4 + $0x3d0] sm:$0xff]
    %v175 = vld [vmem:[#allocation4 + $0x3d8] sm:$0xff]
    %v176 = vld [vmem:[#allocation4 + $0x3e0] sm:$0xff]
    %v177 = vld [vmem:[#allocation4 + $0x3e8] sm:$0xff]
    %v178 = vld [vmem:[#allocation4 + $0x3f0] sm:$0xff]
    %v179 = vld [vmem:[#allocation4 + $0x3f8] sm:$0xff]
    %v180 = vld [vmem:[#allocation4 + $0x400] sm:$0xff]
    %v181 = vld [vmem:[#allocation4 + $0x408] sm:$0xff]
    %v182 = vld [vmem:[#allocation4 + $0x410] sm:$0xff]
    %v183 = vld [vmem:[#allocation4 + $0x418] sm:$0xff]
    %v184 = vld [vmem:[#allocation4 + $0x420] sm:$0xff]
    %v185 = vld [vmem:[#allocation4 + $0x428] sm:$0xff]
    %v186 = vld [vmem:[#allocation4 + $0x430] sm:$0xff]
    %v187 = vld [vmem:[#allocation4 + $0x438] sm:$0xff]
    %v188 = vld [vmem:[#allocation4 + $0x440] sm:$0xff]
    %v189 = vld [vmem:[#allocation4 + $0x448] sm:$0xff]
    %v190 = vld [vmem:[#allocation4 + $0x450] sm:$0xff]
    %v191 = vld [vmem:[#allocation4 + $0x458] sm:$0xff]
    %v192 = vld [vmem:[#allocation4 + $0x460] sm:$0xff]
    %v193 = vld [vmem:[#allocation4 + $0x468] sm:$0xff]
    %v194 = vld [vmem:[#allocation4 + $0x470] sm:$0xff]
    %v195 = vld [vmem:[#allocation4 + $0x478] sm:$0xff]
    %v196 = vld [vmem:[#allocation4 + $0x480] sm:$0xff]
    %v197 = vld [vmem:[#allocation4 + $0x488] sm:$0xff]
    %v198 = vld [vmem:[#allocation4 + $0x490] sm:$0xff]
    %v199 = vld [vmem:[#allocation4 + $0x498] sm:$0xff]
    %v200 = vld [vmem:[#allocation4 + $0x4a0] sm:$0xff]
    %v201 = vld [vmem:[#allocation4 + $0x4a8] sm:$0xff]
    %v202 = vld [vmem:[#allocation4 + $0x4b0] sm:$0xff]
    %v203 = vld [vmem:[#allocation4 + $0x4b8] sm:$0xff]
    %v204 = vld [vmem:[#allocation4 + $0x4c0] sm:$0xff]
    %v205 = vld [vmem:[#allocation4 + $0x4c8] sm:$0xff]
    %v206 = vld [vmem:[#allocation4 + $0x4d0] sm:$0xff]
    %v207 = vld [vmem:[#allocation4 + $0x4d8] sm:$0xff]
    %v208 = vld [vmem:[#allocation4 + $0x4e0] sm:$0xff]
    %v209 = vld [vmem:[#allocation4 + $0x4e8] sm:$0xff]
    %v210 = vld [vmem:[#allocation4 + $0x4f0] sm:$0xff]
    %v211 = vld [vmem:[#allocation4 + $0x4f8] sm:$0xff]
    %v212 = vld [vmem:[#allocation4 + $0x500] sm:$0xff]
    %v213 = vld [vmem:[#allocation4 + $0x508] sm:$0xff]
    %v214 = vld [vmem:[#allocation4 + $0x510] sm:$0xff]
    %v215 = vld [vmem:[#allocation4 + $0x518] sm:$0xff]
    %v216 = vld [vmem:[#allocation4 + $0x520] sm:$0xff]
    %v217 = vld [vmem:[#allocation4 + $0x528] sm:$0xff]
    %v218 = vld [vmem:[#allocation4 + $0x530] sm:$0xff]
    %v219 = vld [vmem:[#allocation4 + $0x538] sm:$0xff]
    %v220 = vld [vmem:[#allocation4 + $0x540] sm:$0xff]
    %v221 = vld [vmem:[#allocation4 + $0x548] sm:$0xff]
    %v222 = vld [vmem:[#allocation4 + $0x550] sm:$0xff]
    %v223 = vld [vmem:[#allocation4 + $0x558] sm:$0xff]
    %v224 = vld [vmem:[#allocation4 + $0x560] sm:$0xff]
    %v225 = vld [vmem:[#allocation4 + $0x568] sm:$0xff]
    %v226 = vld [vmem:[#allocation4 + $0x570] sm:$0xff]
    %v227 = vld [vmem:[#allocation4 + $0x578] sm:$0xff]
    %v228 = vld [vmem:[#allocation4 + $0x580] sm:$0xff]
    %v229 = vld [vmem:[#allocation4 + $0x588] sm:$0xff]
    %v230 = vld [vmem:[#allocation4 + $0x590] sm:$0xff]
    %v231 = vld [vmem:[#allocation4 + $0x598] sm:$0xff]
    %v232 = vld [vmem:[#allocation4 + $0x5a0] sm:$0xff]
    %v233 = vld [vmem:[#allocation4 + $0x5a8] sm:$0xff]
    %v234 = vld [vmem:[#allocation4 + $0x5b0] sm:$0xff]
    %v235 = vld [vmem:[#allocation4 + $0x5b8] sm:$0xff]
    %v236 = vld [vmem:[#allocation4 + $0x5c0] sm:$0xff]
    %v237 = vld [vmem:[#allocation4 + $0x5c8] sm:$0xff]
    %v238 = vld [vmem:[#allocation4 + $0x5d0] sm:$0xff]
    %v239 = vld [vmem:[#allocation4 + $0x5d8] sm:$0xff]
    %v240 = vld [vmem:[#allocation4 + $0x5e0] sm:$0xff]
    %v241 = vld [vmem:[#allocation4 + $0x5e8] sm:$0xff]
    %v242 = vld [vmem:[#allocation4 + $0x5f0] sm:$0xff]
    %v243 = vld [vmem:[#allocation4 + $0x5f8] sm:$0xff]
    %v244 = vld [vmem:[#allocation4 + $0x600] sm:$0xff]
    %v245 = vld [vmem:[#allocation4 + $0x608] sm:$0xff]
    %v246 = vld [vmem:[#allocation4 + $0x610] sm:$0xff]
    %v247 = vld [vmem:[#allocation4 + $0x618] sm:$0xff]
    %v248 = vld [vmem:[#allocation4 + $0x620] sm:$0xff]
    %v249 = vld [vmem:[#allocation4 + $0x628] sm:$0xff]
    %v250 = vld [vmem:[#allocation4 + $0x630] sm:$0xff]
    %v251 = vld [vmem:[#allocation4 + $0x638] sm:$0xff]
    %v252 = vld [vmem:[#allocation4 + $0x640] sm:$0xff]
    %v253 = vld [vmem:[#allocation4 + $0x648] sm:$0xff]
    %v254 = vld [vmem:[#allocation4 + $0x650] sm:$0xff]
    %v255 = vld [vmem:[#allocation4 + $0x658] sm:$0xff]
    %v256 = vld [vmem:[#allocation4 + $0x660] sm:$0xff]
    %v257 = vld [vmem:[#allocation4 + $0x668] sm:$0xff]
    %v258 = vld [vmem:[#allocation4 + $0x670] sm:$0xff]
    %v259 = vld [vmem:[#allocation4 + $0x678] sm:$0xff]
    %v260 = vld [vmem:[#allocation4 + $0x680] sm:$0xff]
    %v261 = vld [vmem:[#allocation4 + $0x688] sm:$0xff]
    %v262 = vld [vmem:[#allocation4 + $0x690] sm:$0xff]
    %v263 = vld [vmem:[#allocation4 + $0x698] sm:$0xff]
    %v264 = vld [vmem:[#allocation4 + $0x6a0] sm:$0xff]
    %v265 = vld [vmem:[#allocation4 + $0x6a8] sm:$0xff]
    %v266 = vld [vmem:[#allocation4 + $0x6b0] sm:$0xff]
    %v267 = vld [vmem:[#allocation4 + $0x6b8] sm:$0xff]
    %v268 = vld [vmem:[#allocation4 + $0x6c0] sm:$0xff]
    %v269 = vld [vmem:[#allocation4 + $0x6c8] sm:$0xff]
    %v270 = vld [vmem:[#allocation4 + $0x6d0] sm:$0xff]
    %v271 = vld [vmem:[#allocation4 + $0x6d8] sm:$0xff]
    %v272 = vld [vmem:[#allocation4 + $0x6e0] sm:$0xff]
    %v273 = vld [vmem:[#allocation4 + $0x6e8] sm:$0xff]
    %v274 = vld [vmem:[#allocation4 + $0x6f0] sm:$0xff]
    %v275 = vld [vmem:[#allocation4 + $0x6f8] sm:$0xff]
    %v276 = vld [vmem:[#allocation4 + $0x700] sm:$0xff]
    %v277 = vld [vmem:[#allocation4 + $0x708] sm:$0xff]
    %v278 = vld [vmem:[#allocation4 + $0x710] sm:$0xff]
    %v279 = vld [vmem:[#allocation4 + $0x718] sm:$0xff]
    %v280 = vld [vmem:[#allocation4 + $0x720] sm:$0xff]
    %v281 = vld [vmem:[#allocation4 + $0x728] sm:$0xff]
    %v282 = vld [vmem:[#allocation4 + $0x730] sm:$0xff]
    %v283 = vld [vmem:[#allocation4 + $0x738] sm:$0xff]
    %v284 = vld [vmem:[#allocation4 + $0x740] sm:$0xff]
    %v285 = vld [vmem:[#allocation4 + $0x748] sm:$0xff]
    %v286 = vld [vmem:[#allocation4 + $0x750] sm:$0xff]
    %v287 = vld [vmem:[#allocation4 + $0x758] sm:$0xff]
    %v288 = vld [vmem:[#allocation4 + $0x760] sm:$0xff]
    %v289 = vld [vmem:[#allocation4 + $0x768] sm:$0xff]
    %v290 = vld [vmem:[#allocation4 + $0x770] sm:$0xff]
    %v291 = vld [vmem:[#allocation4 + $0x778] sm:$0xff]
    %v292 = vld [vmem:[#allocation4 + $0x780] sm:$0xff]
    %v293 = vld [vmem:[#allocation4 + $0x788] sm:$0xff]
    %v294 = vld [vmem:[#allocation4 + $0x790] sm:$0xff]
    %v295 = vld [vmem:[#allocation4 + $0x798] sm:$0xff]
    %v296 = vld [vmem:[#allocation4 + $0x7a0] sm:$0xff]
    %v297 = vld [vmem:[#allocation4 + $0x7a8] sm:$0xff]
    %v298 = vld [vmem:[#allocation4 + $0x7b0] sm:$0xff]
    %v299 = vld [vmem:[#allocation4 + $0x7b8] sm:$0xff]
    %v300 = vld [vmem:[#allocation4 + $0x7c0] sm:$0xff]
    %v301 = vld [vmem:[#allocation4 + $0x7c8] sm:$0xff]
    %v302 = vld [vmem:[#allocation4 + $0x7d0] sm:$0xff]
    %v303 = vld [vmem:[#allocation4 + $0x7d8] sm:$0xff]
    %v304 = vld [vmem:[#allocation4 + $0x7e0] sm:$0xff]
    %v305 = vld [vmem:[#allocation4 + $0x7e8] sm:$0xff]
    %v306 = vld [vmem:[#allocation4 + $0x7f0] sm:$0xff]
    %v307 = vld [vmem:[#allocation4 + $0x7f8] sm:$0xff]
    %v308 = vld [vmem:[#allocation4 + $0x800] sm:$0xff]
    %v309 = vld [vmem:[#allocation4 + $0x808] sm:$0xff]
    %v310 = vld [vmem:[#allocation4 + $0x810] sm:$0xff]
    %v311 = vld [vmem:[#allocation4 + $0x818] sm:$0xff]
    %v312 = vld [vmem:[#allocation4 + $0x820] sm:$0xff]
    %v313 = vld [vmem:[#allocation4 + $0x828] sm:$0xff]
    %v314 = vld [vmem:[#allocation4 + $0x830] sm:$0xff]
    %v315 = vld [vmem:[#allocation4 + $0x838] sm:$0xff]
    %v316 = vld [vmem:[#allocation4 + $0x840] sm:$0xff]
    %v317 = vld [vmem:[#allocation4 + $0x848] sm:$0xff]
    %v318 = vld [vmem:[#allocation4 + $0x850] sm:$0xff]
    %v319 = vld [vmem:[#allocation4 + $0x858] sm:$0xff]
    %v320 = vld [vmem:[#allocation4 + $0x860] sm:$0xff]
    %v321 = vld [vmem:[#allocation4 + $0x868] sm:$0xff]
    %v322 = vld [vmem:[#allocation4 + $0x870] sm:$0xff]
    %v323 = vld [vmem:[#allocation4 + $0x878] sm:$0xff]
    %v324 = vld [vmem:[#allocation4 + $0x880] sm:$0xff]
    %v325 = vld [vmem:[#allocation4 + $0x888] sm:$0xff]
    %v326 = vld [vmem:[#allocation4 + $0x890] sm:$0xff]
    %v327 = vld [vmem:[#allocation4 + $0x898] sm:$0xff]
    %v328 = vld [vmem:[#allocation4 + $0x8a0] sm:$0xff]
    %v329 = vld [vmem:[#allocation4 + $0x8a8] sm:$0xff]
    %v330 = vld [vmem:[#allocation4 + $0x8b0] sm:$0xff]
    %v331 = vld [vmem:[#allocation4 + $0x8b8] sm:$0xff]
    %v332 = vld [vmem:[#allocation4 + $0x8c0] sm:$0xff]
    %v333 = vld [vmem:[#allocation4 + $0x8c8] sm:$0xff]
    %v334 = vld [vmem:[#allocation4 + $0x8d0] sm:$0xff]
    %v335 = vld [vmem:[#allocation4 + $0x8d8] sm:$0xff]
    %v336 = vld [vmem:[#allocation4 + $0x8e0] sm:$0xff]
    %v337 = vld [vmem:[#allocation4 + $0x8e8] sm:$0xff]
    %v338 = vld [vmem:[#allocation4 + $0x8f0] sm:$0xff]
    %v339 = vld [vmem:[#allocation4 + $0x8f8] sm:$0xff]
    %v340 = vld [vmem:[#allocation4 + $0x900] sm:$0xff]
    %v341 = vld [vmem:[#allocation4 + $0x908] sm:$0xff]
    %v342 = vld [vmem:[#allocation4 + $0x910] sm:$0xff]
    %v343 = vld [vmem:[#allocation4 + $0x918] sm:$0xff]
    %v344 = vld [vmem:[#allocation4 + $0x920] sm:$0xff]
    %v345 = vld [vmem:[#allocation4 + $0x928] sm:$0xff]
    %v346 = vld [vmem:[#allocation4 + $0x930] sm:$0xff]
    %v347 = vld [vmem:[#allocation4 + $0x938] sm:$0xff]
    %v348 = vld [vmem:[#allocation4 + $0x940] sm:$0xff]
    %v349 = vld [vmem:[#allocation4 + $0x948] sm:$0xff]
    %v350 = vld [vmem:[#allocation4 + $0x950] sm:$0xff]
    %v351 = vld [vmem:[#allocation4 + $0x958] sm:$0xff]
    %v352 = vld [vmem:[#allocation4 + $0x960] sm:$0xff]
    %v353 = vld [vmem:[#allocation4 + $0x968] sm:$0xff]
    %v354 = vld [vmem:[#allocation4 + $0x970] sm:$0xff]
    %v355 = vld [vmem:[#allocation4 + $0x978] sm:$0xff]
    %v356 = vld [vmem:[#allocation4 + $0x980] sm:$0xff]
    %v357 = vld [vmem:[#allocation4 + $0x988] sm:$0xff]
    %v358 = vld [vmem:[#allocation4 + $0x990] sm:$0xff]
    %v359 = vld [vmem:[#allocation4 + $0x998] sm:$0xff]
    %v360 = vld [vmem:[#allocation4 + $0x9a0] sm:$0xff]
    %v361 = vld [vmem:[#allocation4 + $0x9a8] sm:$0xff]
    %v362 = vld [vmem:[#allocation4 + $0x9b0] sm:$0xff]
    %v363 = vld [vmem:[#allocation4 + $0x9b8] sm:$0xff]
    %v364 = vld [vmem:[#allocation4 + $0x9c0] sm:$0xff]
    %v365 = vld [vmem:[#allocation4 + $0x9c8] sm:$0xff]
    %v366 = vld [vmem:[#allocation4 + $0x9d0] sm:$0xff]
    %v367 = vld [vmem:[#allocation4 + $0x9d8] sm:$0xff]
    %v368 = vld [vmem:[#allocation4 + $0x9e0] sm:$0xff]
    %v369 = vld [vmem:[#allocation4 + $0x9e8] sm:$0xff]
    %v370 = vld [vmem:[#allocation4 + $0x9f0] sm:$0xff]
    %v371 = vld [vmem:[#allocation4 + $0x9f8] sm:$0xff]
    %v372 = vld [vmem:[#allocation4 + $0xa00] sm:$0xff]
    %v373 = vld [vmem:[#allocation4 + $0xa08] sm:$0xff]
    %v374 = vld [vmem:[#allocation4 + $0xa10] sm:$0xff]
    %v375 = vld [vmem:[#allocation4 + $0xa18] sm:$0xff]
    %v376 = vld [vmem:[#allocation4 + $0xa20] sm:$0xf]
    %v377 = vld [vmem:[#allocation4 + $0xa30] sm:$0xf]
    %v378 = vld [vmem:[#allocation4 + $0xa40] sm:$0xf]
    %v379 = vld [vmem:[#allocation4 + $0xa50] sm:$0xf]
    %v380 = vld [vmem:[#allocation4 + $0xa60] sm:$0xf]
    %v381 = vld [vmem:[#allocation4 + $0xa70] sm:$0xf]
    %v382 = vld [vmem:[#allocation4 + $0xa80] sm:$0xf]
    %v383 = vld [vmem:[#allocation4 + $0xa90] sm:$0xf]
    %v384 = vld [vmem:[#allocation4 + $0xaa0] sm:$0xf]
    %v385 = vld [vmem:[#allocation4 + $0xab0] sm:$0xf]
    %v386 = vld [vmem:[#allocation4 + $0xac0] sm:$0xf]
    %v387 = vld [vmem:[#allocation4 + $0xad0] sm:$0xf]
    %v388 = vld [vmem:[#allocation4 + $0xae0] sm:$0xf]
    %v389 = vld [vmem:[#allocation4 + $0xaf0] sm:$0xf]
    %v390 = vld [vmem:[#allocation4 + $0xb00] sm:$0xf]
    %v391 = vld [vmem:[#allocation4 + $0xb10] sm:$0xf]
    %v392 = vld [vmem:[#allocation4 + $0xb20] sm:$0xf]
    %v393 = vld [vmem:[#allocation4 + $0xb30] sm:$0xf]
    %v394 = vld [vmem:[#allocation4 + $0xb40] sm:$0xf]
    %v395 = vld [vmem:[#allocation4 + $0xb50] sm:$0xf]
    %v396 = vld [vmem:[#allocation4 + $0xb60] sm:$0xf]
    %v397 = vld [vmem:[#allocation4 + $0xb70] sm:$0xf]
    %v398 = vld [vmem:[#allocation4 + $0xb80] sm:$0xf]
    %v399 = vld [vmem:[#allocation4 + $0xb90] sm:$0xf]
    %v400 = vld [vmem:[#allocation4 + $0xba0] sm:$0xf]
    %v401 = vld [vmem:[#allocation4 + $0xbb0] sm:$0xf]
    %v402 = vld [vmem:[#allocation4 + $0xbc0] sm:$0xf]
    %v403 = vld [vmem:[#allocation4 + $0xbd0] sm:$0xf]
    %v404 = vld [vmem:[#allocation4 + $0xbe0] sm:$0xf]
    %v405 = vld [vmem:[#allocation4 + $0xbf0] sm:$0xf]
    %v406 = vld [vmem:[#allocation4 + $0xc00] sm:$0xf]
    %v407 = vld [vmem:[#allocation4 + $0xc10] sm:$0xf]
    %v408 = vld [vmem:[#allocation4 + $0xc20] sm:$0xf]
    %v409 = vld [vmem:[#allocation4 + $0xc30] sm:$0xf]
    %v410 = vld [vmem:[#allocation4 + $0xc40] sm:$0xf]
    %v411 = vld [vmem:[#allocation4 + $0xc50] sm:$0xf]
    %v412 = vld [vmem:[#allocation4 + $0xc60] sm:$0xf]
    %v413 = vld [vmem:[#allocation4 + $0xc70] sm:$0xf]
    %v414 = vld [vmem:[#allocation4 + $0xc80] sm:$0xf]
    %v415 = vld [vmem:[#allocation4 + $0xc90] sm:$0xf]
    %v416 = vld [vmem:[#allocation4 + $0xca0] sm:$0xf]
    %v417 = vld [vmem:[#allocation4 + $0xcb0] sm:$0xf]
    %v418 = vld [vmem:[#allocation4 + $0xcc0] sm:$0xf]
    %v419 = vld [vmem:[#allocation4 + $0xcd0] sm:$0xf]
    %v420 = vld [vmem:[#allocation4 + $0xce0] sm:$0xf]
    %v421 = vld [vmem:[#allocation4 + $0xcf0] sm:$0xf]
    %v422 = vld [vmem:[#allocation4 + $0xd00] sm:$0xf]
    %v423 = vld [vmem:[#allocation4 + $0xd10] sm:$0xf]
    %v424 = vld [vmem:[#allocation4 + $0xd20] sm:$0xf]
    %v425 = vld [vmem:[#allocation4 + $0xd30] sm:$0xf]
    %v426 = vld [vmem:[#allocation4 + $0xd40] sm:$0xf]
    %v427 = vld [vmem:[#allocation4 + $0xd50] sm:$0xf]
    %v428 = vld [vmem:[#allocation4 + $0xd60] sm:$0xf]
    %v429 = vld [vmem:[#allocation4 + $0xd70] sm:$0xf]
    %v430 = vld [vmem:[#allocation4 + $0xd80] sm:$0xf]
    %v431 = vld [vmem:[#allocation4 + $0xd90] sm:$0xf]
    %v432 = vld [vmem:[#allocation4 + $0xda0] sm:$0xf]
    %v433 = vld [vmem:[#allocation4 + $0xdb0] sm:$0xf]
    %v434 = vld [vmem:[#allocation4 + $0xdc0] sm:$0xf]
    %v435 = vld [vmem:[#allocation4 + $0xdd0] sm:$0xf]
    %v436 = vld [vmem:[#allocation4 + $0xde0] sm:$0xf]
    %v437 = vld [vmem:[#allocation4 + $0xdf0] sm:$0xf]
    %v438 = vld [vmem:[#allocation4 + $0xe00] sm:$0xf]
    %v439 = vld [vmem:[#allocation4 + $0xe10] sm:$0xf]
    %v440 = vld [vmem:[#allocation4 + $0xe20] sm:$0x11]
    %v441 = vld [vmem:[#allocation4 + $0xe28] sm:$0x11]
    %v442 = vunpack.c.l.bf16 %v440
    %v443 = vunpack.c.h.bf16 %v440
    %v444 = vunpack.c.l.bf16 %v441
    %v445 = vunpack.c.h.bf16 %v441
    %v446 = vld [vmem:[#allocation4 + $0xe20] sm:$0x2]
    %v447 = vunpack.c.l.bf16 %v446
    %v448 = vlaneseq
    %v449 = vshrl.u32 %v448, 7
    %v450 = vsub.s32 0, %v449
    %v451 = vrot.slane %v442, %v450
    %v452 = vlaneseq
    %v453 = vshrl.u32 %v452, 7
    %v454 = vsub.s32 0, %v453
    %v455 = vrot.slane %v443, %v454
    %v456 = vlaneseq
    %v457 = vshrl.u32 %v456, 7
    %v458 = vsub.s32 0, %v457
    %v459 = vrot.slane %v444, %v458
    %v460 = vlaneseq
    %v461 = vshrl.u32 %v460, 7
    %v462 = vsub.s32 0, %v461
    %v463 = vrot.slane %v445, %v462
    %v660 = vunpack.c.l.b16 %v52
    %v661 = vunpack.c.h.b16 %v52
    %v662 = vunpack.c.l.b16 %v53
    %v663 = vunpack.c.h.b16 %v53
    %v664 = vunpack.c.l.b16 %v54
    %v665 = vunpack.c.h.b16 %v54
    %v666 = vunpack.c.l.b16 %v55
    %v667 = vunpack.c.h.b16 %v55
    %v668 = vunpack.c.l.b16 %v56
    %v669 = vunpack.c.h.b16 %v56
    %v670 = vunpack.c.l.b16 %v57
    %v671 = vunpack.c.h.b16 %v57
    %v672 = vunpack.c.l.b16 %v58
    %v673 = vunpack.c.h.b16 %v58
    %v674 = vunpack.c.l.b16 %v59
    %v675 = vunpack.c.h.b16 %v59
    %v676 = vunpack.c.l.b16 %v60
    %v677 = vunpack.c.h.b16 %v60
    %v678 = vunpack.c.l.b16 %v61
    %v679 = vunpack.c.h.b16 %v61
    %v680 = vunpack.c.l.b16 %v62
    %v681 = vunpack.c.h.b16 %v62
    %v682 = vunpack.c.l.b16 %v63
    %v683 = vunpack.c.h.b16 %v63
    %v684 = vunpack.c.l.b16 %v64
    %v685 = vunpack.c.h.b16 %v64
    %v686 = vunpack.c.l.b16 %v65
    %v687 = vunpack.c.h.b16 %v65
    %v688 = vunpack.c.l.b16 %v66
    %v689 = vunpack.c.h.b16 %v66
    %v690 = vunpack.c.l.b16 %v67
    %v691 = vunpack.c.h.b16 %v67
    %v692 = vunpack.c.l.b16 %v68
    %v693 = vunpack.c.h.b16 %v68
    %v694 = vunpack.c.l.b16 %v69
    %v695 = vunpack.c.h.b16 %v69
    %v696 = vunpack.c.l.b16 %v70
    %v697 = vunpack.c.h.b16 %v70
    %v698 = vunpack.c.l.b16 %v71
    %v699 = vunpack.c.h.b16 %v71
    %v700 = vunpack.c.l.b16 %v72
    %v701 = vunpack.c.h.b16 %v72
    %v702 = vunpack.c.l.b16 %v73
    %v703 = vunpack.c.h.b16 %v73
    %v704 = vunpack.c.l.b16 %v74
    %v705 = vunpack.c.h.b16 %v74
    %v706 = vunpack.c.l.b16 %v75
    %v707 = vunpack.c.h.b16 %v75
    %v708 = vunpack.c.l.b16 %v76
    %v709 = vunpack.c.h.b16 %v76
    %v710 = vunpack.c.l.b16 %v77
    %v711 = vunpack.c.h.b16 %v77
    %v712 = vunpack.c.l.b16 %v78
    %v713 = vunpack.c.h.b16 %v78
    %v714 = vunpack.c.l.b16 %v79
    %v715 = vunpack.c.h.b16 %v79
    %v716 = vunpack.c.l.b16 %v80
    %v717 = vunpack.c.h.b16 %v80
    %v718 = vunpack.c.l.b16 %v81
    %v719 = vunpack.c.h.b16 %v81
    %v720 = vunpack.c.l.b16 %v82
    %v721 = vunpack.c.h.b16 %v82
    %v722 = vunpack.c.l.b16 %v83
    %v723 = vunpack.c.h.b16 %v83
    %v724 = vunpack.c.l.b16 %v84
    %v725 = vunpack.c.h.b16 %v84
    %v726 = vunpack.c.l.b16 %v85
    %v727 = vunpack.c.h.b16 %v85
    %v728 = vunpack.c.l.b16 %v86
    %v729 = vunpack.c.h.b16 %v86
    %v730 = vunpack.c.l.b16 %v87
    %v731 = vunpack.c.h.b16 %v87
    %v732 = vunpack.c.l.b16 %v88
    %v733 = vunpack.c.h.b16 %v88
    %v734 = vunpack.c.l.b16 %v89
    %v735 = vunpack.c.h.b16 %v89
    %v736 = vunpack.c.l.b16 %v90
    %v737 = vunpack.c.h.b16 %v90
    %v738 = vunpack.c.l.b16 %v91
    %v739 = vunpack.c.h.b16 %v91
    %v740 = vunpack.c.l.b16 %v92
    %v741 = vunpack.c.h.b16 %v92
    %v742 = vunpack.c.l.b16 %v93
    %v743 = vunpack.c.h.b16 %v93
    %v744 = vunpack.c.l.b16 %v94
    %v745 = vunpack.c.h.b16 %v94
    %v746 = vunpack.c.l.b16 %v95
    %v747 = vunpack.c.h.b16 %v95
    %v748 = vunpack.c.l.b16 %v96
    %v749 = vunpack.c.h.b16 %v96
    %v750 = vunpack.c.l.b16 %v97
    %v751 = vunpack.c.h.b16 %v97
    %v752 = vunpack.c.l.b16 %v98
    %v753 = vunpack.c.h.b16 %v98
    %v754 = vunpack.c.l.b16 %v99
    %v755 = vunpack.c.h.b16 %v99
    %v756 = vunpack.c.l.b16 %v100
    %v757 = vunpack.c.h.b16 %v100
    %v758 = vunpack.c.l.b16 %v101
    %v759 = vunpack.c.h.b16 %v101
    %v760 = vunpack.c.l.b16 %v102
    %v761 = vunpack.c.h.b16 %v102
    %v762 = vunpack.c.l.b16 %v103
    %v763 = vunpack.c.h.b16 %v103
    %v764 = vunpack.c.l.b16 %v104
    %v765 = vunpack.c.h.b16 %v104
    %v766 = vunpack.c.l.b16 %v105
    %v767 = vunpack.c.h.b16 %v105
    %v768 = vunpack.c.l.b16 %v106
    %v769 = vunpack.c.h.b16 %v106
    %v770 = vunpack.c.l.b16 %v107
    %v771 = vunpack.c.h.b16 %v107
    %v772 = vunpack.c.l.b16 %v108
    %v773 = vunpack.c.h.b16 %v108
    %v774 = vunpack.c.l.b16 %v109
    %v775 = vunpack.c.h.b16 %v109
    %v776 = vunpack.c.l.b16 %v110
    %v777 = vunpack.c.h.b16 %v110
    %v778 = vunpack.c.l.b16 %v111
    %v779 = vunpack.c.h.b16 %v111
    %v780 = vunpack.c.l.b16 %v112
    %v781 = vunpack.c.h.b16 %v112
    %v782 = vunpack.c.l.b16 %v113
    %v783 = vunpack.c.h.b16 %v113
    %v784 = vunpack.c.l.b16 %v114
    %v785 = vunpack.c.h.b16 %v114
    %v786 = vunpack.c.l.b16 %v115
    %v787 = vunpack.c.h.b16 %v115
    %v788 = vunpack.c.l.b16 %v116
    %v789 = vunpack.c.h.b16 %v116
    %v790 = vunpack.c.l.b16 %v117
    %v791 = vunpack.c.h.b16 %v117
    %v792 = vunpack.c.l.b16 %v118
    %v793 = vunpack.c.h.b16 %v118
    %v794 = vunpack.c.l.b16 %v119
    %v795 = vunpack.c.h.b16 %v119
    %v796 = vunpack.c.l.b16 %v120
    %v797 = vunpack.c.h.b16 %v120
    %v798 = vunpack.c.l.b16 %v121
    %v799 = vunpack.c.h.b16 %v121
    %v800 = vunpack.c.l.b16 %v122
    %v801 = vunpack.c.h.b16 %v122
    %v802 = vunpack.c.l.b16 %v123
    %v803 = vunpack.c.h.b16 %v123
    %v804 = vunpack.c.l.b16 %v124
    %v805 = vunpack.c.h.b16 %v124
    %v806 = vunpack.c.l.b16 %v125
    %v807 = vunpack.c.h.b16 %v125
    %v808 = vunpack.c.l.b16 %v126
    %v809 = vunpack.c.h.b16 %v126
    %v810 = vunpack.c.l.b16 %v127
    %v811 = vunpack.c.h.b16 %v127
    %v812 = vunpack.c.l.b16 %v128
    %v813 = vunpack.c.h.b16 %v128
    %v814 = vunpack.c.l.b16 %v129
    %v815 = vunpack.c.h.b16 %v129
    %v816 = vunpack.c.l.b16 %v130
    %v817 = vunpack.c.h.b16 %v130
    %v818 = vunpack.c.l.b16 %v131
    %v819 = vunpack.c.h.b16 %v131
    %v820 = vunpack.c.l.b16 %v132
    %v821 = vunpack.c.h.b16 %v132
    %v822 = vunpack.c.l.b16 %v133
    %v823 = vunpack.c.h.b16 %v133
    %v824 = vunpack.c.l.b16 %v134
    %v825 = vunpack.c.h.b16 %v134
    %v826 = vunpack.c.l.b16 %v135
    %v827 = vunpack.c.h.b16 %v135
    %v828 = vunpack.c.l.b16 %v136
    %v829 = vunpack.c.h.b16 %v136
    %v830 = vunpack.c.l.b16 %v137
    %v831 = vunpack.c.h.b16 %v137
    %v832 = vunpack.c.l.b16 %v138
    %v833 = vunpack.c.h.b16 %v138
    %v834 = vunpack.c.l.b16 %v139
    %v835 = vunpack.c.h.b16 %v139
    %v836 = vunpack.c.l.b16 %v140
    %v837 = vunpack.c.h.b16 %v140
    %v838 = vunpack.c.l.b16 %v141
    %v839 = vunpack.c.h.b16 %v141
    %v840 = vunpack.c.l.b16 %v142
    %v841 = vunpack.c.h.b16 %v142
    %v842 = vunpack.c.l.b16 %v143
    %v843 = vunpack.c.h.b16 %v143
    %v844 = vunpack.c.l.b16 %v144
    %v845 = vunpack.c.h.b16 %v144
    %v846 = vunpack.c.l.b16 %v145
    %v847 = vunpack.c.h.b16 %v145
    %v848 = vunpack.c.l.b16 %v146
    %v849 = vunpack.c.h.b16 %v146
    %v850 = vunpack.c.l.b16 %v147
    %v851 = vunpack.c.h.b16 %v147
    %v852 = vunpack.c.l.b16 %v148
    %v853 = vunpack.c.h.b16 %v148
    %v854 = vunpack.c.l.b16 %v149
    %v855 = vunpack.c.h.b16 %v149
    %v856 = vunpack.c.l.b16 %v150
    %v857 = vunpack.c.h.b16 %v150
    %v858 = vunpack.c.l.b16 %v151
    %v859 = vunpack.c.h.b16 %v151
    %v860 = vunpack.c.l.b16 %v152
    %v861 = vunpack.c.h.b16 %v152
    %v862 = vunpack.c.l.b16 %v153
    %v863 = vunpack.c.h.b16 %v153
    %v864 = vunpack.c.l.b16 %v154
    %v865 = vunpack.c.h.b16 %v154
    %v866 = vunpack.c.l.b16 %v155
    %v867 = vunpack.c.h.b16 %v155
    %v868 = vunpack.c.l.b16 %v156
    %v869 = vunpack.c.h.b16 %v156
    %v870 = vunpack.c.l.b16 %v157
    %v871 = vunpack.c.h.b16 %v157
    %v872 = vunpack.c.l.b16 %v158
    %v873 = vunpack.c.h.b16 %v158
    %v874 = vunpack.c.l.b16 %v159
    %v875 = vunpack.c.h.b16 %v159
    %v876 = vunpack.c.l.b16 %v160
    %v877 = vunpack.c.h.b16 %v160
    %v878 = vunpack.c.l.b16 %v161
    %v879 = vunpack.c.h.b16 %v161
    %v880 = vunpack.c.l.b16 %v162
    %v881 = vunpack.c.h.b16 %v162
    %v882 = vunpack.c.l.b16 %v163
    %v883 = vunpack.c.h.b16 %v163
    %v884 = vunpack.c.l.b16 %v164
    %v885 = vunpack.c.h.b16 %v164
    %v886 = vunpack.c.l.b16 %v165
    %v887 = vunpack.c.h.b16 %v165
    %v888 = vunpack.c.l.b16 %v166
    %v889 = vunpack.c.h.b16 %v166
    %v890 = vunpack.c.l.b16 %v167
    %v891 = vunpack.c.h.b16 %v167
    %v892 = vunpack.c.l.b16 %v168
    %v893 = vunpack.c.h.b16 %v168
    %v894 = vunpack.c.l.b16 %v169
    %v895 = vunpack.c.h.b16 %v169
    %v896 = vunpack.c.l.b16 %v170
    %v897 = vunpack.c.h.b16 %v170
    %v898 = vunpack.c.l.b16 %v171
    %v899 = vunpack.c.h.b16 %v171
    %v900 = vunpack.c.l.b16 %v172
    %v901 = vunpack.c.h.b16 %v172
    %v902 = vunpack.c.l.b16 %v173
    %v903 = vunpack.c.h.b16 %v173
    %v904 = vunpack.c.l.b16 %v174
    %v905 = vunpack.c.h.b16 %v174
    %v906 = vunpack.c.l.b16 %v175
    %v907 = vunpack.c.h.b16 %v175
    %v908 = vunpack.c.l.b16 %v176
    %v909 = vunpack.c.h.b16 %v176
    %v910 = vunpack.c.l.b16 %v177
    %v911 = vunpack.c.h.b16 %v177
    %v912 = vunpack.c.l.b16 %v178
    %v913 = vunpack.c.h.b16 %v178
    %v914 = vunpack.c.l.b16 %v179
    %v915 = vunpack.c.h.b16 %v179
    %v916 = vunpack.c.l.b16 %v180
    %v917 = vunpack.c.h.b16 %v180
    %v918 = vunpack.c.l.b16 %v181
    %v919 = vunpack.c.h.b16 %v181
    %v920 = vunpack.c.l.b16 %v182
    %v921 = vunpack.c.h.b16 %v182
    %v922 = vunpack.c.l.b16 %v183
    %v923 = vunpack.c.h.b16 %v183
    %v924 = vunpack.c.l.b16 %v184
    %v925 = vunpack.c.h.b16 %v184
    %v926 = vunpack.c.l.b16 %v185
    %v927 = vunpack.c.h.b16 %v185
    %v928 = vunpack.c.l.b16 %v186
    %v929 = vunpack.c.h.b16 %v186
    %v930 = vunpack.c.l.b16 %v187
    %v931 = vunpack.c.h.b16 %v187
    %v932 = vunpack.c.l.b16 %v188
    %v933 = vunpack.c.h.b16 %v188
    %v934 = vunpack.c.l.b16 %v189
    %v935 = vunpack.c.h.b16 %v189
    %v936 = vunpack.c.l.b16 %v190
    %v937 = vunpack.c.h.b16 %v190
    %v938 = vunpack.c.l.b16 %v191
    %v939 = vunpack.c.h.b16 %v191
    %v940 = vunpack.c.l.b16 %v192
    %v941 = vunpack.c.h.b16 %v192
    %v942 = vunpack.c.l.b16 %v193
    %v943 = vunpack.c.h.b16 %v193
    %v944 = vunpack.c.l.b16 %v194
    %v945 = vunpack.c.h.b16 %v194
    %v946 = vunpack.c.l.b16 %v195
    %v947 = vunpack.c.h.b16 %v195
    %v948 = vunpack.c.l.b16 %v196
    %v949 = vunpack.c.h.b16 %v196
    %v950 = vunpack.c.l.b16 %v197
    %v951 = vunpack.c.h.b16 %v197
    %v952 = vunpack.c.l.b16 %v198
    %v953 = vunpack.c.h.b16 %v198
    %v954 = vunpack.c.l.b16 %v199
    %v955 = vunpack.c.h.b16 %v199
    %v956 = vunpack.c.l.b16 %v200
    %v957 = vunpack.c.h.b16 %v200
    %v958 = vunpack.c.l.b16 %v201
    %v959 = vunpack.c.h.b16 %v201
    %v960 = vunpack.c.l.b16 %v202
    %v961 = vunpack.c.h.b16 %v202
    %v962 = vunpack.c.l.b16 %v203
    %v963 = vunpack.c.h.b16 %v203
    %v964 = vunpack.c.l.b16 %v204
    %v965 = vunpack.c.h.b16 %v204
    %v966 = vunpack.c.l.b16 %v205
    %v967 = vunpack.c.h.b16 %v205
    %v968 = vunpack.c.l.b16 %v206
    %v969 = vunpack.c.h.b16 %v206
    %v970 = vunpack.c.l.b16 %v207
    %v971 = vunpack.c.h.b16 %v207
    %v972 = vunpack.c.l.b16 %v208
    %v973 = vunpack.c.h.b16 %v208
    %v974 = vunpack.c.l.b16 %v209
    %v975 = vunpack.c.h.b16 %v209
    %v976 = vunpack.c.l.b16 %v210
    %v977 = vunpack.c.h.b16 %v210
    %v978 = vunpack.c.l.b16 %v211
    %v979 = vunpack.c.h.b16 %v211
    %v980 = vunpack.c.l.b16 %v212
    %v981 = vunpack.c.h.b16 %v212
    %v982 = vunpack.c.l.b16 %v213
    %v983 = vunpack.c.h.b16 %v213
    %v984 = vunpack.c.l.b16 %v214
    %v985 = vunpack.c.h.b16 %v214
    %v986 = vunpack.c.l.b16 %v215
    %v987 = vunpack.c.h.b16 %v215
    %v988 = vunpack.c.l.b16 %v216
    %v989 = vunpack.c.h.b16 %v216
    %v990 = vunpack.c.l.b16 %v217
    %v991 = vunpack.c.h.b16 %v217
    %v992 = vunpack.c.l.b16 %v218
    %v993 = vunpack.c.h.b16 %v218
    %v994 = vunpack.c.l.b16 %v219
    %v995 = vunpack.c.h.b16 %v219
    %v996 = vunpack.c.l.b16 %v220
    %v997 = vunpack.c.h.b16 %v220
    %v998 = vunpack.c.l.b16 %v221
    %v999 = vunpack.c.h.b16 %v221
    %v1000 = vunpack.c.l.b16 %v222
    %v1001 = vunpack.c.h.b16 %v222
    %v1002 = vunpack.c.l.b16 %v223
    %v1003 = vunpack.c.h.b16 %v223
    %v1004 = vunpack.c.l.b16 %v224
    %v1005 = vunpack.c.h.b16 %v224
    %v1006 = vunpack.c.l.b16 %v225
    %v1007 = vunpack.c.h.b16 %v225
    %v1008 = vunpack.c.l.b16 %v226
    %v1009 = vunpack.c.h.b16 %v226
    %v1010 = vunpack.c.l.b16 %v227
    %v1011 = vunpack.c.h.b16 %v227
    %v1012 = vunpack.c.l.b16 %v228
    %v1013 = vunpack.c.h.b16 %v228
    %v1014 = vunpack.c.l.b16 %v229
    %v1015 = vunpack.c.h.b16 %v229
    %v1016 = vunpack.c.l.b16 %v230
    %v1017 = vunpack.c.h.b16 %v230
    %v1018 = vunpack.c.l.b16 %v231
    %v1019 = vunpack.c.h.b16 %v231
    %v1020 = vunpack.c.l.b16 %v232
    %v1021 = vunpack.c.h.b16 %v232
    %v1022 = vunpack.c.l.b16 %v233
    %v1023 = vunpack.c.h.b16 %v233
    %v1024 = vunpack.c.l.b16 %v234
    %v1025 = vunpack.c.h.b16 %v234
    %v1026 = vunpack.c.l.b16 %v235
    %v1027 = vunpack.c.h.b16 %v235
    %v1028 = vunpack.c.l.b16 %v236
    %v1029 = vunpack.c.h.b16 %v236
    %v1030 = vunpack.c.l.b16 %v237
    %v1031 = vunpack.c.h.b16 %v237
    %v1032 = vunpack.c.l.b16 %v238
    %v1033 = vunpack.c.h.b16 %v238
    %v1034 = vunpack.c.l.b16 %v239
    %v1035 = vunpack.c.h.b16 %v239
    %v1036 = vunpack.c.l.b16 %v240
    %v1037 = vunpack.c.h.b16 %v240
    %v1038 = vunpack.c.l.b16 %v241
    %v1039 = vunpack.c.h.b16 %v241
    %v1040 = vunpack.c.l.b16 %v242
    %v1041 = vunpack.c.h.b16 %v242
    %v1042 = vunpack.c.l.b16 %v243
    %v1043 = vunpack.c.h.b16 %v243
    %v1044 = vunpack.c.l.b16 %v244
    %v1045 = vunpack.c.h.b16 %v244
    %v1046 = vunpack.c.l.b16 %v245
    %v1047 = vunpack.c.h.b16 %v245
    %v1048 = vunpack.c.l.b16 %v246
    %v1049 = vunpack.c.h.b16 %v246
    %v1050 = vunpack.c.l.b16 %v247
    %v1051 = vunpack.c.h.b16 %v247
    %v1052 = vpack.c.b16 %v664, %v660
    %v1053 = vpack.c.b16 %v665, %v661
    %v1054 = vpack.c.b16 %v666, %v662
    %v1055 = vpack.c.b16 %v667, %v663
    %v1056 = vpack.c.b16 %v672, %v668
    %v1057 = vpack.c.b16 %v673, %v669
    %v1058 = vpack.c.b16 %v674, %v670
    %v1059 = vpack.c.b16 %v675, %v671
    %v1060 = vpack.c.b16 %v680, %v676
    %v1061 = vpack.c.b16 %v681, %v677
    %v1062 = vpack.c.b16 %v682, %v678
    %v1063 = vpack.c.b16 %v683, %v679
    %v1064 = vpack.c.b16 %v688, %v684
    %v1065 = vpack.c.b16 %v689, %v685
    %v1066 = vpack.c.b16 %v690, %v686
    %v1067 = vpack.c.b16 %v691, %v687
    %v1068 = vpack.c.b16 %v696, %v692
    %v1069 = vpack.c.b16 %v697, %v693
    %v1070 = vpack.c.b16 %v698, %v694
    %v1071 = vpack.c.b16 %v699, %v695
    %v1072 = vpack.c.b16 %v704, %v700
    %v1073 = vpack.c.b16 %v705, %v701
    %v1074 = vpack.c.b16 %v706, %v702
    %v1075 = vpack.c.b16 %v707, %v703
    %v1076 = vpack.c.b16 %v712, %v708
    %v1077 = vpack.c.b16 %v713, %v709
    %v1078 = vpack.c.b16 %v714, %v710
    %v1079 = vpack.c.b16 %v715, %v711
    %v1080 = vpack.c.b16 %v720, %v716
    %v1081 = vpack.c.b16 %v721, %v717
    %v1082 = vpack.c.b16 %v722, %v718
    %v1083 = vpack.c.b16 %v723, %v719
    %v1084 = vpack.c.b16 %v728, %v724
    %v1085 = vpack.c.b16 %v729, %v725
    %v1086 = vpack.c.b16 %v730, %v726
    %v1087 = vpack.c.b16 %v731, %v727
    %v1088 = vpack.c.b16 %v736, %v732
    %v1089 = vpack.c.b16 %v737, %v733
    %v1090 = vpack.c.b16 %v738, %v734
    %v1091 = vpack.c.b16 %v739, %v735
    %v1092 = vpack.c.b16 %v744, %v740
    %v1093 = vpack.c.b16 %v745, %v741
    %v1094 = vpack.c.b16 %v746, %v742
    %v1095 = vpack.c.b16 %v747, %v743
    %v1096 = vpack.c.b16 %v752, %v748
    %v1097 = vpack.c.b16 %v753, %v749
    %v1098 = vpack.c.b16 %v754, %v750
    %v1099 = vpack.c.b16 %v755, %v751
    %v1100 = vpack.c.b16 %v760, %v756
    %v1101 = vpack.c.b16 %v761, %v757
    %v1102 = vpack.c.b16 %v762, %v758
    %v1103 = vpack.c.b16 %v763, %v759
    %v1104 = vpack.c.b16 %v768, %v764
    %v1105 = vpack.c.b16 %v769, %v765
    %v1106 = vpack.c.b16 %v770, %v766
    %v1107 = vpack.c.b16 %v771, %v767
    %v1108 = vpack.c.b16 %v776, %v772
    %v1109 = vpack.c.b16 %v777, %v773
    %v1110 = vpack.c.b16 %v778, %v774
    %v1111 = vpack.c.b16 %v779, %v775
    %v1112 = vpack.c.b16 %v784, %v780
    %v1113 = vpack.c.b16 %v785, %v781
    %v1114 = vpack.c.b16 %v786, %v782
    %v1115 = vpack.c.b16 %v787, %v783
    %v1116 = vpack.c.b16 %v792, %v788
    %v1117 = vpack.c.b16 %v793, %v789
    %v1118 = vpack.c.b16 %v794, %v790
    %v1119 = vpack.c.b16 %v795, %v791
    %v1120 = vpack.c.b16 %v800, %v796
    %v1121 = vpack.c.b16 %v801, %v797
    %v1122 = vpack.c.b16 %v802, %v798
    %v1123 = vpack.c.b16 %v803, %v799
    %v1124 = vpack.c.b16 %v808, %v804
    %v1125 = vpack.c.b16 %v809, %v805
    %v1126 = vpack.c.b16 %v810, %v806
    %v1127 = vpack.c.b16 %v811, %v807
    %v1128 = vpack.c.b16 %v816, %v812
    %v1129 = vpack.c.b16 %v817, %v813
    %v1130 = vpack.c.b16 %v818, %v814
    %v1131 = vpack.c.b16 %v819, %v815
    %v1132 = vpack.c.b16 %v824, %v820
    %v1133 = vpack.c.b16 %v825, %v821
    %v1134 = vpack.c.b16 %v826, %v822
    %v1135 = vpack.c.b16 %v827, %v823
    %v1136 = vpack.c.b16 %v832, %v828
    %v1137 = vpack.c.b16 %v833, %v829
    %v1138 = vpack.c.b16 %v834, %v830
    %v1139 = vpack.c.b16 %v835, %v831
    %v1140 = vpack.c.b16 %v840, %v836
    %v1141 = vpack.c.b16 %v841, %v837
    %v1142 = vpack.c.b16 %v842, %v838
    %v1143 = vpack.c.b16 %v843, %v839
    %v1144 = vpack.c.b16 %v848, %v844
    %v1145 = vpack.c.b16 %v849, %v845
    %v1146 = vpack.c.b16 %v850, %v846
    %v1147 = vpack.c.b16 %v851, %v847
    %v1148 = vpack.c.b16 %v856, %v852
    %v1149 = vpack.c.b16 %v857, %v853
    %v1150 = vpack.c.b16 %v858, %v854
    %v1151 = vpack.c.b16 %v859, %v855
    %v1152 = vpack.c.b16 %v864, %v860
    %v1153 = vpack.c.b16 %v865, %v861
    %v1154 = vpack.c.b16 %v866, %v862
    %v1155 = vpack.c.b16 %v867, %v863
    %v1156 = vpack.c.b16 %v872, %v868
    %v1157 = vpack.c.b16 %v873, %v869
    %v1158 = vpack.c.b16 %v874, %v870
    %v1159 = vpack.c.b16 %v875, %v871
    %v1160 = vpack.c.b16 %v880, %v876
    %v1161 = vpack.c.b16 %v881, %v877
    %v1162 = vpack.c.b16 %v882, %v878
    %v1163 = vpack.c.b16 %v883, %v879
    %v1164 = vpack.c.b16 %v888, %v884
    %v1165 = vpack.c.b16 %v889, %v885
    %v1166 = vpack.c.b16 %v890, %v886
    %v1167 = vpack.c.b16 %v891, %v887
    %v1168 = vpack.c.b16 %v896, %v892
    %v1169 = vpack.c.b16 %v897, %v893
    %v1170 = vpack.c.b16 %v898, %v894
    %v1171 = vpack.c.b16 %v899, %v895
    %v1172 = vpack.c.b16 %v904, %v900
    %v1173 = vpack.c.b16 %v905, %v901
    %v1174 = vpack.c.b16 %v906, %v902
    %v1175 = vpack.c.b16 %v907, %v903
    %v1176 = vpack.c.b16 %v912, %v908
    %v1177 = vpack.c.b16 %v913, %v909
    %v1178 = vpack.c.b16 %v914, %v910
    %v1179 = vpack.c.b16 %v915, %v911
    %v1180 = vpack.c.b16 %v920, %v916
    %v1181 = vpack.c.b16 %v921, %v917
    %v1182 = vpack.c.b16 %v922, %v918
    %v1183 = vpack.c.b16 %v923, %v919
    %v1184 = vpack.c.b16 %v928, %v924
    %v1185 = vpack.c.b16 %v929, %v925
    %v1186 = vpack.c.b16 %v930, %v926
    %v1187 = vpack.c.b16 %v931, %v927
    %v1188 = vpack.c.b16 %v936, %v932
    %v1189 = vpack.c.b16 %v937, %v933
    %v1190 = vpack.c.b16 %v938, %v934
    %v1191 = vpack.c.b16 %v939, %v935
    %v1192 = vpack.c.b16 %v944, %v940
    %v1193 = vpack.c.b16 %v945, %v941
    %v1194 = vpack.c.b16 %v946, %v942
    %v1195 = vpack.c.b16 %v947, %v943
    %v1196 = vpack.c.b16 %v952, %v948
    %v1197 = vpack.c.b16 %v953, %v949
    %v1198 = vpack.c.b16 %v954, %v950
    %v1199 = vpack.c.b16 %v955, %v951
    %v1200 = vpack.c.b16 %v960, %v956
    %v1201 = vpack.c.b16 %v961, %v957
    %v1202 = vpack.c.b16 %v962, %v958
    %v1203 = vpack.c.b16 %v963, %v959
    %v1204 = vpack.c.b16 %v968, %v964
    %v1205 = vpack.c.b16 %v969, %v965
    %v1206 = vpack.c.b16 %v970, %v966
    %v1207 = vpack.c.b16 %v971, %v967
    %v1208 = vpack.c.b16 %v976, %v972
    %v1209 = vpack.c.b16 %v977, %v973
    %v1210 = vpack.c.b16 %v978, %v974
    %v1211 = vpack.c.b16 %v979, %v975
    %v1212 = vpack.c.b16 %v984, %v980
    %v1213 = vpack.c.b16 %v985, %v981
    %v1214 = vpack.c.b16 %v986, %v982
    %v1215 = vpack.c.b16 %v987, %v983
    %v1216 = vpack.c.b16 %v992, %v988
    %v1217 = vpack.c.b16 %v993, %v989
    %v1218 = vpack.c.b16 %v994, %v990
    %v1219 = vpack.c.b16 %v995, %v991
    %v1220 = vpack.c.b16 %v1000, %v996
    %v1221 = vpack.c.b16 %v1001, %v997
    %v1222 = vpack.c.b16 %v1002, %v998
    %v1223 = vpack.c.b16 %v1003, %v999
    %v1224 = vpack.c.b16 %v1008, %v1004
    %v1225 = vpack.c.b16 %v1009, %v1005
    %v1226 = vpack.c.b16 %v1010, %v1006
    %v1227 = vpack.c.b16 %v1011, %v1007
    %v1228 = vpack.c.b16 %v1016, %v1012
    %v1229 = vpack.c.b16 %v1017, %v1013
    %v1230 = vpack.c.b16 %v1018, %v1014
    %v1231 = vpack.c.b16 %v1019, %v1015
    %v1232 = vpack.c.b16 %v1024, %v1020
    %v1233 = vpack.c.b16 %v1025, %v1021
    %v1234 = vpack.c.b16 %v1026, %v1022
    %v1235 = vpack.c.b16 %v1027, %v1023
    %v1236 = vpack.c.b16 %v1032, %v1028
    %v1237 = vpack.c.b16 %v1033, %v1029
    %v1238 = vpack.c.b16 %v1034, %v1030
    %v1239 = vpack.c.b16 %v1035, %v1031
    %v1240 = vpack.c.b16 %v1040, %v1036
    %v1241 = vpack.c.b16 %v1041, %v1037
    %v1242 = vpack.c.b16 %v1042, %v1038
    %v1243 = vpack.c.b16 %v1043, %v1039
    %v1244 = vpack.c.b16 %v1048, %v1044
    %v1245 = vpack.c.b16 %v1049, %v1045
    %v1246 = vpack.c.b16 %v1050, %v1046
    %v1247 = vpack.c.b16 %v1051, %v1047
    %vm1444 = vcmask 130048
    %v1446 = vsel %vm1444, %v51, 0
    %1448 = vmatprep.subr.bf16.mxu0 %v1053
    %1449 = vmatpush1.bf16.msra.mxu0 %v1052
    %1450 = vmatprep.subr.bf16.mxu0 %v1057
    %1451 = vmatpush1.bf16.msra.mxu0 %v1056
    %1452 = vmatprep.subr.bf16.mxu0 %v1061
    %1453 = vmatpush1.bf16.msra.mxu0 %v1060
    %1454 = vmatprep.subr.bf16.mxu0 %v1065
    %1455 = vmatpush1.bf16.msra.mxu0 %v1064
    %1456 = vmatprep.subr.bf16.mxu0 %v1069
    %1457 = vmatpush1.bf16.msra.mxu0 %v1068
    %1458 = vmatprep.subr.bf16.mxu0 %v1073
    %1459 = vmatpush1.bf16.msra.mxu0 %v1072
    %1460 = vmatprep.subr.bf16.mxu0 %v1077
    %1461 = vmatpush1.bf16.msra.mxu0 %v1076
    %1462 = vmatprep.subr.bf16.mxu0 %v1081
    %1463 = vmatpush1.bf16.msra.mxu0 %v1080
    %1464 = vmatprep.subr.bf16.mxu0 %v1085
    %1465 = vmatpush1.bf16.msra.mxu0 %v1084
    %1466 = vmatprep.subr.bf16.mxu0 %v1089
    %1467 = vmatpush1.bf16.msra.mxu0 %v1088
    %1468 = vmatprep.subr.bf16.mxu0 %v1093
    %1469 = vmatpush1.bf16.msra.mxu0 %v1092
    %1470 = vmatprep.subr.bf16.mxu0 %v1097
    %1471 = vmatpush1.bf16.msra.mxu0 %v1096
    %1472 = vmatprep.subr.bf16.mxu0 %v1101
    %1473 = vmatpush1.bf16.msra.mxu0 %v1100
    %1474 = vmatprep.subr.bf16.mxu0 %v1105
    %1475 = vmatpush1.bf16.msra.mxu0 %v1104
    %1476 = vmatprep.subr.bf16.mxu0 %v1109
    %1477 = vmatpush1.bf16.msra.mxu0 %v1108
    %1478 = vmatprep.subr.bf16.mxu0 %v1113
    %1479 = vmatpush1.bf16.msra.mxu0 %v1112
    %1480 = vmatprep.mubr.bf16.mxu0 %v46
    %1481 = vmatmul.mubr.bf16.gmra.mrb[0].mxu0 %v45
    %v1482 = vpop.f32.mrb[0].mxu0
    %v1483 = vadd.f32 %v451, %v1482
    %v1484 = vpop.f32.mrb[0].mxu0
    %v1485 = vadd.f32 %v455, %v1484
    %v1486 = vpop.f32.mrb[0].mxu0
    %v1487 = vpop.f32.mrb[0].mxu0
    %1488 = vdwg.mxu0
    %1489 = vmatprep.subr.bf16.mxu0 %v1117
    %1490 = vmatpush1.bf16.msra.mxu0 %v1116
    %1491 = vmatprep.subr.bf16.mxu0 %v1121
    %1492 = vmatpush1.bf16.msra.mxu0 %v1120
    %1493 = vmatprep.subr.bf16.mxu0 %v1125
    %1494 = vmatpush1.bf16.msra.mxu0 %v1124
    %1495 = vmatprep.subr.bf16.mxu0 %v1129
    %1496 = vmatpush1.bf16.msra.mxu0 %v1128
    %1497 = vmatprep.subr.bf16.mxu0 %v1133
    %1498 = vmatpush1.bf16.msra.mxu0 %v1132
    %1499 = vmatprep.subr.bf16.mxu0 %v1137
    %1500 = vmatpush1.bf16.msra.mxu0 %v1136
    %1501 = vmatprep.subr.bf16.mxu0 %v1141
    %1502 = vmatpush1.bf16.msra.mxu0 %v1140
    %1503 = vmatprep.subr.bf16.mxu0 %v1145
    %1504 = vmatpush1.bf16.msra.mxu0 %v1144
    %1505 = vmatprep.subr.bf16.mxu0 %v1149
    %1506 = vmatpush1.bf16.msra.mxu0 %v1148
    %1507 = vmatprep.subr.bf16.mxu0 %v1153
    %1508 = vmatpush1.bf16.msra.mxu0 %v1152
    %1509 = vmatprep.subr.bf16.mxu0 %v1157
    %1510 = vmatpush1.bf16.msra.mxu0 %v1156
    %1511 = vmatprep.subr.bf16.mxu0 %v1161
    %1512 = vmatpush1.bf16.msra.mxu0 %v1160
    %1513 = vmatprep.subr.bf16.mxu0 %v1165
    %1514 = vmatpush1.bf16.msra.mxu0 %v1164
    %1515 = vmatprep.subr.bf16.mxu0 %v1169
    %1516 = vmatpush1.bf16.msra.mxu0 %v1168
    %1517 = vmatprep.subr.bf16.mxu0 %v1173
    %1518 = vmatpush1.bf16.msra.mxu0 %v1172
    %1519 = vmatprep.subr.bf16.mxu0 %v1177
    %1520 = vmatpush1.bf16.msra.mxu0 %v1176
    %1521 = vmatprep.mubr.bf16.mxu0 %v48
    %1522 = vmatmul.mubr.bf16.gmra.mrb[0].mxu0 %v47
    %v1523 = vpop.f32.mrb[0].mxu0
    %v1524 = vadd.f32 %v1483, %v1523
    %v1525 = vpop.f32.mrb[0].mxu0
    %v1526 = vadd.f32 %v1485, %v1525
    %v1527 = vpop.f32.mrb[0].mxu0
    %v1528 = vpop.f32.mrb[0].mxu0
    %1529 = vdwg.mxu0
    %1530 = vmatprep.subr.bf16.mxu0 %v1181
    %1531 = vmatpush1.bf16.msra.mxu0 %v1180
    %1532 = vmatprep.subr.bf16.mxu0 %v1185
    %1533 = vmatpush1.bf16.msra.mxu0 %v1184
    %1534 = vmatprep.subr.bf16.mxu0 %v1189
    %1535 = vmatpush1.bf16.msra.mxu0 %v1188
    %1536 = vmatprep.subr.bf16.mxu0 %v1193
    %1537 = vmatpush1.bf16.msra.mxu0 %v1192
    %1538 = vmatprep.subr.bf16.mxu0 %v1197
    %1539 = vmatpush1.bf16.msra.mxu0 %v1196
    %1540 = vmatprep.subr.bf16.mxu0 %v1201
    %1541 = vmatpush1.bf16.msra.mxu0 %v1200
    %1542 = vmatprep.subr.bf16.mxu0 %v1205
    %1543 = vmatpush1.bf16.msra.mxu0 %v1204
    %1544 = vmatprep.subr.bf16.mxu0 %v1209
    %1545 = vmatpush1.bf16.msra.mxu0 %v1208
    %1546 = vmatprep.subr.bf16.mxu0 %v1213
    %1547 = vmatpush1.bf16.msra.mxu0 %v1212
    %1548 = vmatprep.subr.bf16.mxu0 %v1217
    %1549 = vmatpush1.bf16.msra.mxu0 %v1216
    %1550 = vmatprep.subr.bf16.mxu0 %v1221
    %1551 = vmatpush1.bf16.msra.mxu0 %v1220
    %1552 = vmatprep.subr.bf16.mxu0 %v1225
    %1553 = vmatpush1.bf16.msra.mxu0 %v1224
    %1554 = vmatprep.subr.bf16.mxu0 %v1229
    %1555 = vmatpush1.bf16.msra.mxu0 %v1228
    %1556 = vmatprep.subr.bf16.mxu0 %v1233
    %1557 = vmatpush1.bf16.msra.mxu0 %v1232
    %1558 = vmatprep.subr.bf16.mxu0 %v1237
    %1559 = vmatpush1.bf16.msra.mxu0 %v1236
    %1560 = vmatprep.subr.bf16.mxu0 %v1241
    %1561 = vmatpush1.bf16.msra.mxu0 %v1240
    %1562 = vmatprep.mubr.bf16.mxu0 %v50
    %1563 = vmatmul.mubr.bf16.gmra.mrb[0].mxu0 %v49
    %v1564 = vpop.f32.mrb[0].mxu0
    %v1565 = vadd.f32 %v1524, %v1564
    %v1566 = vpop.f32.mrb[0].mxu0
    %v1567 = vadd.f32 %v1526, %v1566
    %v1568 = vpop.f32.mrb[0].mxu0
    %v1569 = vpop.f32.mrb[0].mxu0
    %1570 = vdwg.mxu0
    %1571 = vmatprep.subr.bf16.mxu0 %v1245
    %1572 = vmatpush1.bf16.msra.mxu0 %v1244
    %1573 = vmatprep.subr.bf16.mxu0 0
    %1574 = vmatpush1.bf16.msra.mxu0 0
    %1575 = vmatprep.subr.bf16.mxu0 0
    %1576 = vmatpush1.bf16.msra.mxu0 0
    %1577 = vmatprep.subr.bf16.mxu0 0
    %1578 = vmatpush1.bf16.msra.mxu0 0
    %1579 = vmatprep.subr.bf16.mxu0 0
    %1580 = vmatpush1.bf16.msra.mxu0 0
    %1581 = vmatprep.subr.bf16.mxu0 0
    %1582 = vmatpush1.bf16.msra.mxu0 0
    %1583 = vmatprep.subr.bf16.mxu0 0
    %1584 = vmatpush1.bf16.msra.mxu0 0
    %1585 = vmatprep.subr.bf16.mxu0 0
    %1586 = vmatpush1.bf16.msra.mxu0 0
    %1587 = vmatprep.subr.bf16.mxu0 0
    %1588 = vmatpush1.bf16.msra.mxu0 0
    %1589 = vmatprep.subr.bf16.mxu0 0
    %1590 = vmatpush1.bf16.msra.mxu0 0
    %1591 = vmatprep.subr.bf16.mxu0 0
    %1592 = vmatpush1.bf16.msra.mxu0 0
    %1593 = vmatprep.subr.bf16.mxu0 0
    %1594 = vmatpush1.bf16.msra.mxu0 0
    %1595 = vmatprep.subr.bf16.mxu0 0
    %1596 = vmatpush1.bf16.msra.mxu0 0
    %1597 = vmatprep.subr.bf16.mxu0 0
    %1598 = vmatpush1.bf16.msra.mxu0 0
    %1599 = vmatprep.subr.bf16.mxu0 0
    %1600 = vmatpush1.bf16.msra.mxu0 0
    %1601 = vmatprep.subr.bf16.mxu0 0
    %1602 = vmatpush1.bf16.msra.mxu0 0
    %1603 = vmatprep.mubr.bf16.mxu0 0
    %1604 = vmatmul.mubr.bf16.gmra.mrb[0].mxu0 %v1446
    %v1605 = vpop.f32.mrb[0].mxu0
    %v1606 = vadd.f32 %v1565, %v1605
    %v1607 = vpop.f32.mrb[0].mxu0
    %v1608 = vadd.f32 %v1567, %v1607
    %v1609 = vpop.f32.mrb[0].mxu0
    %v1610 = vpop.f32.mrb[0].mxu0
    %1611 = vdwg.mxu0
    %1612 = vmatprep.subr.bf16.mxu0 %v1055
    %1613 = vmatpush1.bf16.msra.mxu0 %v1054
    %1614 = vmatprep.subr.bf16.mxu0 %v1059
    %1615 = vmatpush1.bf16.msra.mxu0 %v1058
    %1616 = vmatprep.subr.bf16.mxu0 %v1063
    %1617 = vmatpush1.bf16.msra.mxu0 %v1062
    %1618 = vmatprep.subr.bf16.mxu0 %v1067
    %1619 = vmatpush1.bf16.msra.mxu0 %v1066
    %1620 = vmatprep.subr.bf16.mxu0 %v1071
    %1621 = vmatpush1.bf16.msra.mxu0 %v1070
    %1622 = vmatprep.subr.bf16.mxu0 %v1075
    %1623 = vmatpush1.bf16.msra.mxu0 %v1074
    %1624 = vmatprep.subr.bf16.mxu0 %v1079
    %1625 = vmatpush1.bf16.msra.mxu0 %v1078
    %1626 = vmatprep.subr.bf16.mxu0 %v1083
    %1627 = vmatpush1.bf16.msra.mxu0 %v1082
    %1628 = vmatprep.subr.bf16.mxu0 %v1087
    %1629 = vmatpush1.bf16.msra.mxu0 %v1086
    %1630 = vmatprep.subr.bf16.mxu0 %v1091
    %1631 = vmatpush1.bf16.msra.mxu0 %v1090
    %1632 = vmatprep.subr.bf16.mxu0 %v1095
    %1633 = vmatpush1.bf16.msra.mxu0 %v1094
    %1634 = vmatprep.subr.bf16.mxu0 %v1099
    %1635 = vmatpush1.bf16.msra.mxu0 %v1098
    %1636 = vmatprep.subr.bf16.mxu0 %v1103
    %1637 = vmatpush1.bf16.msra.mxu0 %v1102
    %1638 = vmatprep.subr.bf16.mxu0 %v1107
    %1639 = vmatpush1.bf16.msra.mxu0 %v1106
    %1640 = vmatprep.subr.bf16.mxu0 %v1111
    %1641 = vmatpush1.bf16.msra.mxu0 %v1110
    %1642 = vmatprep.subr.bf16.mxu0 %v1115
    %1643 = vmatpush1.bf16.msra.mxu0 %v1114
    %1644 = vmatprep.mubr.bf16.mxu0 %v46
    %1645 = vmatmul.mubr.bf16.gmra.mrb[0].mxu0 %v45
    %v1646 = vpop.f32.mrb[0].mxu0
    %v1647 = vadd.f32 %v459, %v1646
    %v1648 = vpop.f32.mrb[0].mxu0
    %v1649 = vadd.f32 %v463, %v1648
    %v1650 = vpop.f32.mrb[0].mxu0
    %v1651 = vpop.f32.mrb[0].mxu0
    %1652 = vdwg.mxu0
    %1653 = vmatprep.subr.bf16.mxu0 %v1119
    %1654 = vmatpush1.bf16.msra.mxu0 %v1118
    %1655 = vmatprep.subr.bf16.mxu0 %v1123
    %1656 = vmatpush1.bf16.msra.mxu0 %v1122
    %1657 = vmatprep.subr.bf16.mxu0 %v1127
    %1658 = vmatpush1.bf16.msra.mxu0 %v1126
    %1659 = vmatprep.subr.bf16.mxu0 %v1131
    %1660 = vmatpush1.bf16.msra.mxu0 %v1130
    %1661 = vmatprep.subr.bf16.mxu0 %v1135
    %1662 = vmatpush1.bf16.msra.mxu0 %v1134
    %1663 = vmatprep.subr.bf16.mxu0 %v1139
    %1664 = vmatpush1.bf16.msra.mxu0 %v1138
    %1665 = vmatprep.subr.bf16.mxu0 %v1143
    %1666 = vmatpush1.bf16.msra.mxu0 %v1142
    %1667 = vmatprep.subr.bf16.mxu0 %v1147
    %1668 = vmatpush1.bf16.msra.mxu0 %v1146
    %1669 = vmatprep.subr.bf16.mxu0 %v1151
    %1670 = vmatpush1.bf16.msra.mxu0 %v1150
    %1671 = vmatprep.subr.bf16.mxu0 %v1155
    %1672 = vmatpush1.bf16.msra.mxu0 %v1154
    %1673 = vmatprep.subr.bf16.mxu0 %v1159
    %1674 = vmatpush1.bf16.msra.mxu0 %v1158
    %1675 = vmatprep.subr.bf16.mxu0 %v1163
    %1676 = vmatpush1.bf16.msra.mxu0 %v1162
    %1677 = vmatprep.subr.bf16.mxu0 %v1167
    %1678 = vmatpush1.bf16.msra.mxu0 %v1166
    %1679 = vmatprep.subr.bf16.mxu0 %v1171
    %1680 = vmatpush1.bf16.msra.mxu0 %v1170
    %1681 = vmatprep.subr.bf16.mxu0 %v1175
    %1682 = vmatpush1.bf16.msra.mxu0 %v1174
    %1683 = vmatprep.subr.bf16.mxu0 %v1179
    %1684 = vmatpush1.bf16.msra.mxu0 %v1178
    %1685 = vmatprep.mubr.bf16.mxu0 %v48
    %1686 = vmatmul.mubr.bf16.gmra.mrb[0].mxu0 %v47
    %v1687 = vpop.f32.mrb[0].mxu0
    %v1688 = vadd.f32 %v1647, %v1687
    %v1689 = vpop.f32.mrb[0].mxu0
    %v1690 = vadd.f32 %v1649, %v1689
    %v1691 = vpop.f32.mrb[0].mxu0
    %v1692 = vpop.f32.mrb[0].mxu0
    %1693 = vdwg.mxu0
    %1694 = vmatprep.subr.bf16.mxu0 %v1183
    %1695 = vmatpush1.bf16.msra.mxu0 %v1182
    %1696 = vmatprep.subr.bf16.mxu0 %v1187
    %1697 = vmatpush1.bf16.msra.mxu0 %v1186
    %1698 = vmatprep.subr.bf16.mxu0 %v1191
    %1699 = vmatpush1.bf16.msra.mxu0 %v1190
    %1700 = vmatprep.subr.bf16.mxu0 %v1195
    %1701 = vmatpush1.bf16.msra.mxu0 %v1194
    %1702 = vmatprep.subr.bf16.mxu0 %v1199
    %1703 = vmatpush1.bf16.msra.mxu0 %v1198
    %1704 = vmatprep.subr.bf16.mxu0 %v1203
    %1705 = vmatpush1.bf16.msra.mxu0 %v1202
    %1706 = vmatprep.subr.bf16.mxu0 %v1207
    %1707 = vmatpush1.bf16.msra.mxu0 %v1206
    %1708 = vmatprep.subr.bf16.mxu0 %v1211
    %1709 = vmatpush1.bf16.msra.mxu0 %v1210
    %1710 = vmatprep.subr.bf16.mxu0 %v1215
    %1711 = vmatpush1.bf16.msra.mxu0 %v1214
    %1712 = vmatprep.subr.bf16.mxu0 %v1219
    %1713 = vmatpush1.bf16.msra.mxu0 %v1218
    %1714 = vmatprep.subr.bf16.mxu0 %v1223
    %1715 = vmatpush1.bf16.msra.mxu0 %v1222
    %1716 = vmatprep.subr.bf16.mxu0 %v1227
    %1717 = vmatpush1.bf16.msra.mxu0 %v1226
    %1718 = vmatprep.subr.bf16.mxu0 %v1231
    %1719 = vmatpush1.bf16.msra.mxu0 %v1230
    %1720 = vmatprep.subr.bf16.mxu0 %v1235
    %1721 = vmatpush1.bf16.msra.mxu0 %v1234
    %1722 = vmatprep.subr.bf16.mxu0 %v1239
    %1723 = vmatpush1.bf16.msra.mxu0 %v1238
    %1724 = vmatprep.subr.bf16.mxu0 %v1243
    %1725 = vmatpush1.bf16.msra.mxu0 %v1242
    %1726 = vmatprep.mubr.bf16.mxu0 %v50
    %1727 = vmatmul.mubr.bf16.gmra.mrb[0].mxu0 %v49
    %v1728 = vpop.f32.mrb[0].mxu0
    %v1729 = vadd.f32 %v1688, %v1728
    %v1730 = vpop.f32.mrb[0].mxu0
    %v1731 = vadd.f32 %v1690, %v1730
    %v1732 = vpop.f32.mrb[0].mxu0
    %v1733 = vpop.f32.mrb[0].mxu0
    %1734 = vdwg.mxu0
    %1735 = vmatprep.subr.bf16.mxu0 %v1247
    %1736 = vmatpush1.bf16.msra.mxu0 %v1246
    %1737 = vmatprep.subr.bf16.mxu0 0
    %1738 = vmatpush1.bf16.msra.mxu0 0
    %1739 = vmatprep.subr.bf16.mxu0 0
    %1740 = vmatpush1.bf16.msra.mxu0 0
    %1741 = vmatprep.subr.bf16.mxu0 0
    %1742 = vmatpush1.bf16.msra.mxu0 0
    %1743 = vmatprep.subr.bf16.mxu0 0
    %1744 = vmatpush1.bf16.msra.mxu0 0
    %1745 = vmatprep.subr.bf16.mxu0 0
    %1746 = vmatpush1.bf16.msra.mxu0 0
    %1747 = vmatprep.subr.bf16.mxu0 0
    %1748 = vmatpush1.bf16.msra.mxu0 0
    %1749 = vmatprep.subr.bf16.mxu0 0
    %1750 = vmatpush1.bf16.msra.mxu0 0
    %1751 = vmatprep.subr.bf16.mxu0 0
    %1752 = vmatpush1.bf16.msra.mxu0 0
    %1753 = vmatprep.subr.bf16.mxu0 0
    %1754 = vmatpush1.bf16.msra.mxu0 0
    %1755 = vmatprep.subr.bf16.mxu0 0
    %1756 = vmatpush1.bf16.msra.mxu0 0
    %1757 = vmatprep.subr.bf16.mxu0 0
    %1758 = vmatpush1.bf16.msra.mxu0 0
    %1759 = vmatprep.subr.bf16.mxu0 0
    %1760 = vmatpush1.bf16.msra.mxu0 0
    %1761 = vmatprep.subr.bf16.mxu0 0
    %1762 = vmatpush1.bf16.msra.mxu0 0
    %1763 = vmatprep.subr.bf16.mxu0 0
    %1764 = vmatpush1.bf16.msra.mxu0 0
    %1765 = vmatprep.subr.bf16.mxu0 0
    %1766 = vmatpush1.bf16.msra.mxu0 0
    %1767 = vmatprep.mubr.bf16.mxu0 0
    %1768 = vmatmul.mubr.bf16.gmra.mrb[0].mxu0 %v1446
    %v1769 = vpop.f32.mrb[0].mxu0
    %v1770 = vadd.f32 %v1729, %v1769
    %v1771 = vpop.f32.mrb[0].mxu0
    %v1772 = vadd.f32 %v1731, %v1771
    %v1773 = vpop.f32.mrb[0].mxu0
    %v1774 = vpop.f32.mrb[0].mxu0
    %1775 = vdwg.mxu0
    %v1776 = vmax.f32 %v1606, 0.0
    %v1777 = vmax.f32 %v1608, 0.0
    %v1778 = vmax.f32 %v1770, 0.0
    %v1779 = vmax.f32 %v1772, 0.0
    %v1780 = vpack.c.bf16 %v1776, %v1776
    %v1781 = vpack.c.bf16 %v1777, %v1777
    %v1782 = vpack.c.bf16 %v1778, %v1778
    %v1783 = vpack.c.bf16 %v1779, %v1779
    %v1784 = vlaneseq
    %v1785 = vshrl.u32 %v1784, 7
    %v1786 = vsub.s32 1, %v1785
    %v1787 = vrot.slane %v442, %v1786
    %v1788 = vlaneseq
    %v1789 = vshrl.u32 %v1788, 7
    %v1790 = vsub.s32 1, %v1789
    %v1791 = vrot.slane %v443, %v1790
    %v1792 = vlaneseq
    %v1793 = vshrl.u32 %v1792, 7
    %v1794 = vsub.s32 1, %v1793
    %v1795 = vrot.slane %v444, %v1794
    %v1796 = vlaneseq
    %v1797 = vshrl.u32 %v1796, 7
    %v1798 = vsub.s32 1, %v1797
    %v1799 = vrot.slane %v445, %v1798
    %v1928 = vunpack.c.l.b16 %v248
    %v1929 = vunpack.c.h.b16 %v248
    %v1930 = vunpack.c.l.b16 %v249
    %v1931 = vunpack.c.h.b16 %v249
    %v1932 = vunpack.c.l.b16 %v250
    %v1933 = vunpack.c.h.b16 %v250
    %v1934 = vunpack.c.l.b16 %v251
    %v1935 = vunpack.c.h.b16 %v251
    %v1936 = vunpack.c.l.b16 %v252
    %v1937 = vunpack.c.h.b16 %v252
    %v1938 = vunpack.c.l.b16 %v253
    %v1939 = vunpack.c.h.b16 %v253
    %v1940 = vunpack.c.l.b16 %v254
    %v1941 = vunpack.c.h.b16 %v254
    %v1942 = vunpack.c.l.b16 %v255
    %v1943 = vunpack.c.h.b16 %v255
    %v1944 = vunpack.c.l.b16 %v256
    %v1945 = vunpack.c.h.b16 %v256
    %v1946 = vunpack.c.l.b16 %v257
    %v1947 = vunpack.c.h.b16 %v257
    %v1948 = vunpack.c.l.b16 %v258
    %v1949 = vunpack.c.h.b16 %v258
    %v1950 = vunpack.c.l.b16 %v259
    %v1951 = vunpack.c.h.b16 %v259
    %v1952 = vunpack.c.l.b16 %v260
    %v1953 = vunpack.c.h.b16 %v260
    %v1954 = vunpack.c.l.b16 %v261
    %v1955 = vunpack.c.h.b16 %v261
    %v1956 = vunpack.c.l.b16 %v262
    %v1957 = vunpack.c.h.b16 %v262
    %v1958 = vunpack.c.l.b16 %v263
    %v1959 = vunpack.c.h.b16 %v263
    %v1960 = vunpack.c.l.b16 %v264
    %v1961 = vunpack.c.h.b16 %v264
    %v1962 = vunpack.c.l.b16 %v265
    %v1963 = vunpack.c.h.b16 %v265
    %v1964 = vunpack.c.l.b16 %v266
    %v1965 = vunpack.c.h.b16 %v266
    %v1966 = vunpack.c.l.b16 %v267
    %v1967 = vunpack.c.h.b16 %v267
    %v1968 = vunpack.c.l.b16 %v268
    %v1969 = vunpack.c.h.b16 %v268
    %v1970 = vunpack.c.l.b16 %v269
    %v1971 = vunpack.c.h.b16 %v269
    %v1972 = vunpack.c.l.b16 %v270
    %v1973 = vunpack.c.h.b16 %v270
    %v1974 = vunpack.c.l.b16 %v271
    %v1975 = vunpack.c.h.b16 %v271
    %v1976 = vunpack.c.l.b16 %v272
    %v1977 = vunpack.c.h.b16 %v272
    %v1978 = vunpack.c.l.b16 %v273
    %v1979 = vunpack.c.h.b16 %v273
    %v1980 = vunpack.c.l.b16 %v274
    %v1981 = vunpack.c.h.b16 %v274
    %v1982 = vunpack.c.l.b16 %v275
    %v1983 = vunpack.c.h.b16 %v275
    %v1984 = vunpack.c.l.b16 %v276
    %v1985 = vunpack.c.h.b16 %v276
    %v1986 = vunpack.c.l.b16 %v277
    %v1987 = vunpack.c.h.b16 %v277
    %v1988 = vunpack.c.l.b16 %v278
    %v1989 = vunpack.c.h.b16 %v278
    %v1990 = vunpack.c.l.b16 %v279
    %v1991 = vunpack.c.h.b16 %v279
    %v1992 = vunpack.c.l.b16 %v280
    %v1993 = vunpack.c.h.b16 %v280
    %v1994 = vunpack.c.l.b16 %v281
    %v1995 = vunpack.c.h.b16 %v281
    %v1996 = vunpack.c.l.b16 %v282
    %v1997 = vunpack.c.h.b16 %v282
    %v1998 = vunpack.c.l.b16 %v283
    %v1999 = vunpack.c.h.b16 %v283
    %v2000 = vunpack.c.l.b16 %v284
    %v2001 = vunpack.c.h.b16 %v284
    %v2002 = vunpack.c.l.b16 %v285
    %v2003 = vunpack.c.h.b16 %v285
    %v2004 = vunpack.c.l.b16 %v286
    %v2005 = vunpack.c.h.b16 %v286
    %v2006 = vunpack.c.l.b16 %v287
    %v2007 = vunpack.c.h.b16 %v287
    %v2008 = vunpack.c.l.b16 %v288
    %v2009 = vunpack.c.h.b16 %v288
    %v2010 = vunpack.c.l.b16 %v289
    %v2011 = vunpack.c.h.b16 %v289
    %v2012 = vunpack.c.l.b16 %v290
    %v2013 = vunpack.c.h.b16 %v290
    %v2014 = vunpack.c.l.b16 %v291
    %v2015 = vunpack.c.h.b16 %v291
    %v2016 = vunpack.c.l.b16 %v292
    %v2017 = vunpack.c.h.b16 %v292
    %v2018 = vunpack.c.l.b16 %v293
    %v2019 = vunpack.c.h.b16 %v293
    %v2020 = vunpack.c.l.b16 %v294
    %v2021 = vunpack.c.h.b16 %v294
    %v2022 = vunpack.c.l.b16 %v295
    %v2023 = vunpack.c.h.b16 %v295
    %v2024 = vunpack.c.l.b16 %v296
    %v2025 = vunpack.c.h.b16 %v296
    %v2026 = vunpack.c.l.b16 %v297
    %v2027 = vunpack.c.h.b16 %v297
    %v2028 = vunpack.c.l.b16 %v298
    %v2029 = vunpack.c.h.b16 %v298
    %v2030 = vunpack.c.l.b16 %v299
    %v2031 = vunpack.c.h.b16 %v299
    %v2032 = vunpack.c.l.b16 %v300
    %v2033 = vunpack.c.h.b16 %v300
    %v2034 = vunpack.c.l.b16 %v301
    %v2035 = vunpack.c.h.b16 %v301
    %v2036 = vunpack.c.l.b16 %v302
    %v2037 = vunpack.c.h.b16 %v302
    %v2038 = vunpack.c.l.b16 %v303
    %v2039 = vunpack.c.h.b16 %v303
    %v2040 = vunpack.c.l.b16 %v304
    %v2041 = vunpack.c.h.b16 %v304
    %v2042 = vunpack.c.l.b16 %v305
    %v2043 = vunpack.c.h.b16 %v305
    %v2044 = vunpack.c.l.b16 %v306
    %v2045 = vunpack.c.h.b16 %v306
    %v2046 = vunpack.c.l.b16 %v307
    %v2047 = vunpack.c.h.b16 %v307
    %v2048 = vunpack.c.l.b16 %v308
    %v2049 = vunpack.c.h.b16 %v308
    %v2050 = vunpack.c.l.b16 %v309
    %v2051 = vunpack.c.h.b16 %v309
    %v2052 = vunpack.c.l.b16 %v310
    %v2053 = vunpack.c.h.b16 %v310
    %v2054 = vunpack.c.l.b16 %v311
    %v2055 = vunpack.c.h.b16 %v311
    %v2056 = vunpack.c.l.b16 %v312
    %v2057 = vunpack.c.h.b16 %v312
    %v2058 = vunpack.c.l.b16 %v313
    %v2059 = vunpack.c.h.b16 %v313
    %v2060 = vunpack.c.l.b16 %v314
    %v2061 = vunpack.c.h.b16 %v314
    %v2062 = vunpack.c.l.b16 %v315
    %v2063 = vunpack.c.h.b16 %v315
    %v2064 = vunpack.c.l.b16 %v316
    %v2065 = vunpack.c.h.b16 %v316
    %v2066 = vunpack.c.l.b16 %v317
    %v2067 = vunpack.c.h.b16 %v317
    %v2068 = vunpack.c.l.b16 %v318
    %v2069 = vunpack.c.h.b16 %v318
    %v2070 = vunpack.c.l.b16 %v319
    %v2071 = vunpack.c.h.b16 %v319
    %v2072 = vunpack.c.l.b16 %v320
    %v2073 = vunpack.c.h.b16 %v320
    %v2074 = vunpack.c.l.b16 %v321
    %v2075 = vunpack.c.h.b16 %v321
    %v2076 = vunpack.c.l.b16 %v322
    %v2077 = vunpack.c.h.b16 %v322
    %v2078 = vunpack.c.l.b16 %v323
    %v2079 = vunpack.c.h.b16 %v323
    %v2080 = vunpack.c.l.b16 %v324
    %v2081 = vunpack.c.h.b16 %v324
    %v2082 = vunpack.c.l.b16 %v325
    %v2083 = vunpack.c.h.b16 %v325
    %v2084 = vunpack.c.l.b16 %v326
    %v2085 = vunpack.c.h.b16 %v326
    %v2086 = vunpack.c.l.b16 %v327
    %v2087 = vunpack.c.h.b16 %v327
    %v2088 = vunpack.c.l.b16 %v328
    %v2089 = vunpack.c.h.b16 %v328
    %v2090 = vunpack.c.l.b16 %v329
    %v2091 = vunpack.c.h.b16 %v329
    %v2092 = vunpack.c.l.b16 %v330
    %v2093 = vunpack.c.h.b16 %v330
    %v2094 = vunpack.c.l.b16 %v331
    %v2095 = vunpack.c.h.b16 %v331
    %v2096 = vunpack.c.l.b16 %v332
    %v2097 = vunpack.c.h.b16 %v332
    %v2098 = vunpack.c.l.b16 %v333
    %v2099 = vunpack.c.h.b16 %v333
    %v2100 = vunpack.c.l.b16 %v334
    %v2101 = vunpack.c.h.b16 %v334
    %v2102 = vunpack.c.l.b16 %v335
    %v2103 = vunpack.c.h.b16 %v335
    %v2104 = vunpack.c.l.b16 %v336
    %v2105 = vunpack.c.h.b16 %v336
    %v2106 = vunpack.c.l.b16 %v337
    %v2107 = vunpack.c.h.b16 %v337
    %v2108 = vunpack.c.l.b16 %v338
    %v2109 = vunpack.c.h.b16 %v338
    %v2110 = vunpack.c.l.b16 %v339
    %v2111 = vunpack.c.h.b16 %v339
    %v2112 = vunpack.c.l.b16 %v340
    %v2113 = vunpack.c.h.b16 %v340
    %v2114 = vunpack.c.l.b16 %v341
    %v2115 = vunpack.c.h.b16 %v341
    %v2116 = vunpack.c.l.b16 %v342
    %v2117 = vunpack.c.h.b16 %v342
    %v2118 = vunpack.c.l.b16 %v343
    %v2119 = vunpack.c.h.b16 %v343
    %v2120 = vunpack.c.l.b16 %v344
    %v2121 = vunpack.c.h.b16 %v344
    %v2122 = vunpack.c.l.b16 %v345
    %v2123 = vunpack.c.h.b16 %v345
    %v2124 = vunpack.c.l.b16 %v346
    %v2125 = vunpack.c.h.b16 %v346
    %v2126 = vunpack.c.l.b16 %v347
    %v2127 = vunpack.c.h.b16 %v347
    %v2128 = vunpack.c.l.b16 %v348
    %v2129 = vunpack.c.h.b16 %v348
    %v2130 = vunpack.c.l.b16 %v349
    %v2131 = vunpack.c.h.b16 %v349
    %v2132 = vunpack.c.l.b16 %v350
    %v2133 = vunpack.c.h.b16 %v350
    %v2134 = vunpack.c.l.b16 %v351
    %v2135 = vunpack.c.h.b16 %v351
    %v2136 = vunpack.c.l.b16 %v352
    %v2137 = vunpack.c.h.b16 %v352
    %v2138 = vunpack.c.l.b16 %v353
    %v2139 = vunpack.c.h.b16 %v353
    %v2140 = vunpack.c.l.b16 %v354
    %v2141 = vunpack.c.h.b16 %v354
    %v2142 = vunpack.c.l.b16 %v355
    %v2143 = vunpack.c.h.b16 %v355
    %v2144 = vunpack.c.l.b16 %v356
    %v2145 = vunpack.c.h.b16 %v356
    %v2146 = vunpack.c.l.b16 %v357
    %v2147 = vunpack.c.h.b16 %v357
    %v2148 = vunpack.c.l.b16 %v358
    %v2149 = vunpack.c.h.b16 %v358
    %v2150 = vunpack.c.l.b16 %v359
    %v2151 = vunpack.c.h.b16 %v359
    %v2152 = vunpack.c.l.b16 %v360
    %v2153 = vunpack.c.h.b16 %v360
    %v2154 = vunpack.c.l.b16 %v361
    %v2155 = vunpack.c.h.b16 %v361
    %v2156 = vunpack.c.l.b16 %v362
    %v2157 = vunpack.c.h.b16 %v362
    %v2158 = vunpack.c.l.b16 %v363
    %v2159 = vunpack.c.h.b16 %v363
    %v2160 = vunpack.c.l.b16 %v364
    %v2161 = vunpack.c.h.b16 %v364
    %v2162 = vunpack.c.l.b16 %v365
    %v2163 = vunpack.c.h.b16 %v365
    %v2164 = vunpack.c.l.b16 %v366
    %v2165 = vunpack.c.h.b16 %v366
    %v2166 = vunpack.c.l.b16 %v367
    %v2167 = vunpack.c.h.b16 %v367
    %v2168 = vunpack.c.l.b16 %v368
    %v2169 = vunpack.c.h.b16 %v368
    %v2170 = vunpack.c.l.b16 %v369
    %v2171 = vunpack.c.h.b16 %v369
    %v2172 = vunpack.c.l.b16 %v370
    %v2173 = vunpack.c.h.b16 %v370
    %v2174 = vunpack.c.l.b16 %v371
    %v2175 = vunpack.c.h.b16 %v371
    %v2176 = vunpack.c.l.b16 %v372
    %v2177 = vunpack.c.h.b16 %v372
    %v2178 = vunpack.c.l.b16 %v373
    %v2179 = vunpack.c.h.b16 %v373
    %v2180 = vunpack.c.l.b16 %v374
    %v2181 = vunpack.c.h.b16 %v374
    %v2182 = vunpack.c.l.b16 %v375
    %v2183 = vunpack.c.h.b16 %v375
    %v2184 = vpack.c.b16 %v1932, %v1928
    %v2185 = vpack.c.b16 %v1933, %v1929
    %v2186 = vpack.c.b16 %v1934, %v1930
    %v2187 = vpack.c.b16 %v1935, %v1931
    %v2188 = vpack.c.b16 %v1940, %v1936
    %v2189 = vpack.c.b16 %v1941, %v1937
    %v2190 = vpack.c.b16 %v1942, %v1938
    %v2191 = vpack.c.b16 %v1943, %v1939
    %v2192 = vpack.c.b16 %v1948, %v1944
    %v2193 = vpack.c.b16 %v1949, %v1945
    %v2194 = vpack.c.b16 %v1950, %v1946
    %v2195 = vpack.c.b16 %v1951, %v1947
    %v2196 = vpack.c.b16 %v1956, %v1952
    %v2197 = vpack.c.b16 %v1957, %v1953
    %v2198 = vpack.c.b16 %v1958, %v1954
    %v2199 = vpack.c.b16 %v1959, %v1955
    %v2200 = vpack.c.b16 %v1964, %v1960
    %v2201 = vpack.c.b16 %v1965, %v1961
    %v2202 = vpack.c.b16 %v1966, %v1962
    %v2203 = vpack.c.b16 %v1967, %v1963
    %v2204 = vpack.c.b16 %v1972, %v1968
    %v2205 = vpack.c.b16 %v1973, %v1969
    %v2206 = vpack.c.b16 %v1974, %v1970
    %v2207 = vpack.c.b16 %v1975, %v1971
    %v2208 = vpack.c.b16 %v1980, %v1976
    %v2209 = vpack.c.b16 %v1981, %v1977
    %v2210 = vpack.c.b16 %v1982, %v1978
    %v2211 = vpack.c.b16 %v1983, %v1979
    %v2212 = vpack.c.b16 %v1988, %v1984
    %v2213 = vpack.c.b16 %v1989, %v1985
    %v2214 = vpack.c.b16 %v1990, %v1986
    %v2215 = vpack.c.b16 %v1991, %v1987
    %v2216 = vpack.c.b16 %v1996, %v1992
    %v2217 = vpack.c.b16 %v1997, %v1993
    %v2218 = vpack.c.b16 %v1998, %v1994
    %v2219 = vpack.c.b16 %v1999, %v1995
    %v2220 = vpack.c.b16 %v2004, %v2000
    %v2221 = vpack.c.b16 %v2005, %v2001
    %v2222 = vpack.c.b16 %v2006, %v2002
    %v2223 = vpack.c.b16 %v2007, %v2003
    %v2224 = vpack.c.b16 %v2012, %v2008
    %v2225 = vpack.c.b16 %v2013, %v2009
    %v2226 = vpack.c.b16 %v2014, %v2010
    %v2227 = vpack.c.b16 %v2015, %v2011
    %v2228 = vpack.c.b16 %v2020, %v2016
    %v2229 = vpack.c.b16 %v2021, %v2017
    %v2230 = vpack.c.b16 %v2022, %v2018
    %v2231 = vpack.c.b16 %v2023, %v2019
    %v2232 = vpack.c.b16 %v2028, %v2024
    %v2233 = vpack.c.b16 %v2029, %v2025
    %v2234 = vpack.c.b16 %v2030, %v2026
    %v2235 = vpack.c.b16 %v2031, %v2027
    %v2236 = vpack.c.b16 %v2036, %v2032
    %v2237 = vpack.c.b16 %v2037, %v2033
    %v2238 = vpack.c.b16 %v2038, %v2034
    %v2239 = vpack.c.b16 %v2039, %v2035
    %v2240 = vpack.c.b16 %v2044, %v2040
    %v2241 = vpack.c.b16 %v2045, %v2041
    %v2242 = vpack.c.b16 %v2046, %v2042
    %v2243 = vpack.c.b16 %v2047, %v2043
    %v2244 = vpack.c.b16 %v2052, %v2048
    %v2245 = vpack.c.b16 %v2053, %v2049
    %v2246 = vpack.c.b16 %v2054, %v2050
    %v2247 = vpack.c.b16 %v2055, %v2051
    %v2248 = vpack.c.b16 %v2060, %v2056
    %v2249 = vpack.c.b16 %v2061, %v2057
    %v2250 = vpack.c.b16 %v2062, %v2058
    %v2251 = vpack.c.b16 %v2063, %v2059
    %v2252 = vpack.c.b16 %v2068, %v2064
    %v2253 = vpack.c.b16 %v2069, %v2065
    %v2254 = vpack.c.b16 %v2070, %v2066
    %v2255 = vpack.c.b16 %v2071, %v2067
    %v2256 = vpack.c.b16 %v2076, %v2072
    %v2257 = vpack.c.b16 %v2077, %v2073
    %v2258 = vpack.c.b16 %v2078, %v2074
    %v2259 = vpack.c.b16 %v2079, %v2075
    %v2260 = vpack.c.b16 %v2084, %v2080
    %v2261 = vpack.c.b16 %v2085, %v2081
    %v2262 = vpack.c.b16 %v2086, %v2082
    %v2263 = vpack.c.b16 %v2087, %v2083
    %v2264 = vpack.c.b16 %v2092, %v2088
    %v2265 = vpack.c.b16 %v2093, %v2089
    %v2266 = vpack.c.b16 %v2094, %v2090
    %v2267 = vpack.c.b16 %v2095, %v2091
    %v2268 = vpack.c.b16 %v2100, %v2096
    %v2269 = vpack.c.b16 %v2101, %v2097
    %v2270 = vpack.c.b16 %v2102, %v2098
    %v2271 = vpack.c.b16 %v2103, %v2099
    %v2272 = vpack.c.b16 %v2108, %v2104
    %v2273 = vpack.c.b16 %v2109, %v2105
    %v2274 = vpack.c.b16 %v2110, %v2106
    %v2275 = vpack.c.b16 %v2111, %v2107
    %v2276 = vpack.c.b16 %v2116, %v2112
    %v2277 = vpack.c.b16 %v2117, %v2113
    %v2278 = vpack.c.b16 %v2118, %v2114
    %v2279 = vpack.c.b16 %v2119, %v2115
    %v2280 = vpack.c.b16 %v2124, %v2120
    %v2281 = vpack.c.b16 %v2125, %v2121
    %v2282 = vpack.c.b16 %v2126, %v2122
    %v2283 = vpack.c.b16 %v2127, %v2123
    %v2284 = vpack.c.b16 %v2132, %v2128
    %v2285 = vpack.c.b16 %v2133, %v2129
    %v2286 = vpack.c.b16 %v2134, %v2130
    %v2287 = vpack.c.b16 %v2135, %v2131
    %v2288 = vpack.c.b16 %v2140, %v2136
    %v2289 = vpack.c.b16 %v2141, %v2137
    %v2290 = vpack.c.b16 %v2142, %v2138
    %v2291 = vpack.c.b16 %v2143, %v2139
    %v2292 = vpack.c.b16 %v2148, %v2144
    %v2293 = vpack.c.b16 %v2149, %v2145
    %v2294 = vpack.c.b16 %v2150, %v2146
    %v2295 = vpack.c.b16 %v2151, %v2147
    %v2296 = vpack.c.b16 %v2156, %v2152
    %v2297 = vpack.c.b16 %v2157, %v2153
    %v2298 = vpack.c.b16 %v2158, %v2154
    %v2299 = vpack.c.b16 %v2159, %v2155
    %v2300 = vpack.c.b16 %v2164, %v2160
    %v2301 = vpack.c.b16 %v2165, %v2161
    %v2302 = vpack.c.b16 %v2166, %v2162
    %v2303 = vpack.c.b16 %v2167, %v2163
    %v2304 = vpack.c.b16 %v2172, %v2168
    %v2305 = vpack.c.b16 %v2173, %v2169
    %v2306 = vpack.c.b16 %v2174, %v2170
    %v2307 = vpack.c.b16 %v2175, %v2171
    %v2308 = vpack.c.b16 %v2180, %v2176
    %v2309 = vpack.c.b16 %v2181, %v2177
    %v2310 = vpack.c.b16 %v2182, %v2178
    %v2311 = vpack.c.b16 %v2183, %v2179
    %2440 = vmatprep.subr.bf16.mxu0 %v2185
    %2441 = vmatpush1.bf16.msra.mxu0 %v2184
    %2442 = vmatprep.subr.bf16.mxu0 %v2189
    %2443 = vmatpush1.bf16.msra.mxu0 %v2188
    %2444 = vmatprep.subr.bf16.mxu0 %v2193
    %2445 = vmatpush1.bf16.msra.mxu0 %v2192
    %2446 = vmatprep.subr.bf16.mxu0 %v2197
    %2447 = vmatpush1.bf16.msra.mxu0 %v2196
    %2448 = vmatprep.subr.bf16.mxu0 %v2201
    %2449 = vmatpush1.bf16.msra.mxu0 %v2200
    %2450 = vmatprep.subr.bf16.mxu0 %v2205
    %2451 = vmatpush1.bf16.msra.mxu0 %v2204
    %2452 = vmatprep.subr.bf16.mxu0 %v2209
    %2453 = vmatpush1.bf16.msra.mxu0 %v2208
    %2454 = vmatprep.subr.bf16.mxu0 %v2213
    %2455 = vmatpush1.bf16.msra.mxu0 %v2212
    %2456 = vmatprep.subr.bf16.mxu0 %v2217
    %2457 = vmatpush1.bf16.msra.mxu0 %v2216
    %2458 = vmatprep.subr.bf16.mxu0 %v2221
    %2459 = vmatpush1.bf16.msra.mxu0 %v2220
    %2460 = vmatprep.subr.bf16.mxu0 %v2225
    %2461 = vmatpush1.bf16.msra.mxu0 %v2224
    %2462 = vmatprep.subr.bf16.mxu0 %v2229
    %2463 = vmatpush1.bf16.msra.mxu0 %v2228
    %2464 = vmatprep.subr.bf16.mxu0 %v2233
    %2465 = vmatpush1.bf16.msra.mxu0 %v2232
    %2466 = vmatprep.subr.bf16.mxu0 %v2237
    %2467 = vmatpush1.bf16.msra.mxu0 %v2236
    %2468 = vmatprep.subr.bf16.mxu0 %v2241
    %2469 = vmatpush1.bf16.msra.mxu0 %v2240
    %2470 = vmatprep.subr.bf16.mxu0 %v2245
    %2471 = vmatpush1.bf16.msra.mxu0 %v2244
    %2472 = vmatprep.mubr.bf16.mxu0 %v1781
    %2473 = vmatmul.mubr.bf16.gmra.mrb[0].mxu0 %v1780
    %v2474 = vpop.f32.mrb[0].mxu0
    %v2475 = vadd.f32 %v1787, %v2474
    %v2476 = vpop.f32.mrb[0].mxu0
    %v2477 = vadd.f32 %v1791, %v2476
    %v2478 = vpop.f32.mrb[0].mxu0
    %v2479 = vpop.f32.mrb[0].mxu0
    %2480 = vdwg.mxu0
    %2481 = vmatprep.subr.bf16.mxu0 %v2249
    %2482 = vmatpush1.bf16.msra.mxu0 %v2248
    %2483 = vmatprep.subr.bf16.mxu0 %v2253
    %2484 = vmatpush1.bf16.msra.mxu0 %v2252
    %2485 = vmatprep.subr.bf16.mxu0 %v2257
    %2486 = vmatpush1.bf16.msra.mxu0 %v2256
    %2487 = vmatprep.subr.bf16.mxu0 %v2261
    %2488 = vmatpush1.bf16.msra.mxu0 %v2260
    %2489 = vmatprep.subr.bf16.mxu0 %v2265
    %2490 = vmatpush1.bf16.msra.mxu0 %v2264
    %2491 = vmatprep.subr.bf16.mxu0 %v2269
    %2492 = vmatpush1.bf16.msra.mxu0 %v2268
    %2493 = vmatprep.subr.bf16.mxu0 %v2273
    %2494 = vmatpush1.bf16.msra.mxu0 %v2272
    %2495 = vmatprep.subr.bf16.mxu0 %v2277
    %2496 = vmatpush1.bf16.msra.mxu0 %v2276
    %2497 = vmatprep.subr.bf16.mxu0 %v2281
    %2498 = vmatpush1.bf16.msra.mxu0 %v2280
    %2499 = vmatprep.subr.bf16.mxu0 %v2285
    %2500 = vmatpush1.bf16.msra.mxu0 %v2284
    %2501 = vmatprep.subr.bf16.mxu0 %v2289
    %2502 = vmatpush1.bf16.msra.mxu0 %v2288
    %2503 = vmatprep.subr.bf16.mxu0 %v2293
    %2504 = vmatpush1.bf16.msra.mxu0 %v2292
    %2505 = vmatprep.subr.bf16.mxu0 %v2297
    %2506 = vmatpush1.bf16.msra.mxu0 %v2296
    %2507 = vmatprep.subr.bf16.mxu0 %v2301
    %2508 = vmatpush1.bf16.msra.mxu0 %v2300
    %2509 = vmatprep.subr.bf16.mxu0 %v2305
    %2510 = vmatpush1.bf16.msra.mxu0 %v2304
    %2511 = vmatprep.subr.bf16.mxu0 %v2309
    %2512 = vmatpush1.bf16.msra.mxu0 %v2308
    %2513 = vmatprep.mubr.bf16.mxu0 %v1783
    %2514 = vmatmul.mubr.bf16.gmra.mrb[0].mxu0 %v1782
    %v2515 = vpop.f32.mrb[0].mxu0
    %v2516 = vadd.f32 %v2475, %v2515
    %v2517 = vpop.f32.mrb[0].mxu0
    %v2518 = vadd.f32 %v2477, %v2517
    %v2519 = vpop.f32.mrb[0].mxu0
    %v2520 = vpop.f32.mrb[0].mxu0
    %2521 = vdwg.mxu0
    %2522 = vmatprep.subr.bf16.mxu0 %v2187
    %2523 = vmatpush1.bf16.msra.mxu0 %v2186
    %2524 = vmatprep.subr.bf16.mxu0 %v2191
    %2525 = vmatpush1.bf16.msra.mxu0 %v2190
    %2526 = vmatprep.subr.bf16.mxu0 %v2195
    %2527 = vmatpush1.bf16.msra.mxu0 %v2194
    %2528 = vmatprep.subr.bf16.mxu0 %v2199
    %2529 = vmatpush1.bf16.msra.mxu0 %v2198
    %2530 = vmatprep.subr.bf16.mxu0 %v2203
    %2531 = vmatpush1.bf16.msra.mxu0 %v2202
    %2532 = vmatprep.subr.bf16.mxu0 %v2207
    %2533 = vmatpush1.bf16.msra.mxu0 %v2206
    %2534 = vmatprep.subr.bf16.mxu0 %v2211
    %2535 = vmatpush1.bf16.msra.mxu0 %v2210
    %2536 = vmatprep.subr.bf16.mxu0 %v2215
    %2537 = vmatpush1.bf16.msra.mxu0 %v2214
    %2538 = vmatprep.subr.bf16.mxu0 %v2219
    %2539 = vmatpush1.bf16.msra.mxu0 %v2218
    %2540 = vmatprep.subr.bf16.mxu0 %v2223
    %2541 = vmatpush1.bf16.msra.mxu0 %v2222
    %2542 = vmatprep.subr.bf16.mxu0 %v2227
    %2543 = vmatpush1.bf16.msra.mxu0 %v2226
    %2544 = vmatprep.subr.bf16.mxu0 %v2231
    %2545 = vmatpush1.bf16.msra.mxu0 %v2230
    %2546 = vmatprep.subr.bf16.mxu0 %v2235
    %2547 = vmatpush1.bf16.msra.mxu0 %v2234
    %2548 = vmatprep.subr.bf16.mxu0 %v2239
    %2549 = vmatpush1.bf16.msra.mxu0 %v2238
    %2550 = vmatprep.subr.bf16.mxu0 %v2243
    %2551 = vmatpush1.bf16.msra.mxu0 %v2242
    %2552 = vmatprep.subr.bf16.mxu0 %v2247
    %2553 = vmatpush1.bf16.msra.mxu0 %v2246
    %2554 = vmatprep.mubr.bf16.mxu0 %v1781
    %2555 = vmatmul.mubr.bf16.gmra.mrb[0].mxu0 %v1780
    %v2556 = vpop.f32.mrb[0].mxu0
    %v2557 = vadd.f32 %v1795, %v2556
    %v2558 = vpop.f32.mrb[0].mxu0
    %v2559 = vadd.f32 %v1799, %v2558
    %v2560 = vpop.f32.mrb[0].mxu0
    %v2561 = vpop.f32.mrb[0].mxu0
    %2562 = vdwg.mxu0
    %2563 = vmatprep.subr.bf16.mxu0 %v2251
    %2564 = vmatpush1.bf16.msra.mxu0 %v2250
    %2565 = vmatprep.subr.bf16.mxu0 %v2255
    %2566 = vmatpush1.bf16.msra.mxu0 %v2254
    %2567 = vmatprep.subr.bf16.mxu0 %v2259
    %2568 = vmatpush1.bf16.msra.mxu0 %v2258
    %2569 = vmatprep.subr.bf16.mxu0 %v2263
    %2570 = vmatpush1.bf16.msra.mxu0 %v2262
    %2571 = vmatprep.subr.bf16.mxu0 %v2267
    %2572 = vmatpush1.bf16.msra.mxu0 %v2266
    %2573 = vmatprep.subr.bf16.mxu0 %v2271
    %2574 = vmatpush1.bf16.msra.mxu0 %v2270
    %2575 = vmatprep.subr.bf16.mxu0 %v2275
    %2576 = vmatpush1.bf16.msra.mxu0 %v2274
    %2577 = vmatprep.subr.bf16.mxu0 %v2279
    %2578 = vmatpush1.bf16.msra.mxu0 %v2278
    %2579 = vmatprep.subr.bf16.mxu0 %v2283
    %2580 = vmatpush1.bf16.msra.mxu0 %v2282
    %2581 = vmatprep.subr.bf16.mxu0 %v2287
    %2582 = vmatpush1.bf16.msra.mxu0 %v2286
    %2583 = vmatprep.subr.bf16.mxu0 %v2291
    %2584 = vmatpush1.bf16.msra.mxu0 %v2290
    %2585 = vmatprep.subr.bf16.mxu0 %v2295
    %2586 = vmatpush1.bf16.msra.mxu0 %v2294
    %2587 = vmatprep.subr.bf16.mxu0 %v2299
    %2588 = vmatpush1.bf16.msra.mxu0 %v2298
    %2589 = vmatprep.subr.bf16.mxu0 %v2303
    %2590 = vmatpush1.bf16.msra.mxu0 %v2302
    %2591 = vmatprep.subr.bf16.mxu0 %v2307
    %2592 = vmatpush1.bf16.msra.mxu0 %v2306
    %2593 = vmatprep.subr.bf16.mxu0 %v2311
    %2594 = vmatpush1.bf16.msra.mxu0 %v2310
    %2595 = vmatprep.mubr.bf16.mxu0 %v1783
    %2596 = vmatmul.mubr.bf16.gmra.mrb[0].mxu0 %v1782
    %v2597 = vpop.f32.mrb[0].mxu0
    %v2598 = vadd.f32 %v2557, %v2597
    %v2599 = vpop.f32.mrb[0].mxu0
    %v2600 = vadd.f32 %v2559, %v2599
    %v2601 = vpop.f32.mrb[0].mxu0
    %v2602 = vpop.f32.mrb[0].mxu0
    %2603 = vdwg.mxu0
    %v2604 = vmax.f32 %v2516, 0.0
    %v2605 = vmax.f32 %v2518, 0.0
    %v2606 = vmax.f32 %v2598, 0.0
    %v2607 = vmax.f32 %v2600, 0.0
    %v2608 = vpack.c.bf16 %v2604, %v2604
    %v2609 = vpack.c.bf16 %v2605, %v2605
    %v2610 = vpack.c.bf16 %v2606, %v2606
    %v2611 = vpack.c.bf16 %v2607, %v2607
    %v2612 = vlaneseq
    %v2613 = vshrl.u32 %v2612, 7
    %v2614 = vsub.s32 2, %v2613
    %v2615 = vrot.slane %v447, %v2614
    %v2680 = vunpack.c.l.b16 %v376
    %v2681 = vunpack.c.l.b16 %v377
    %v2682 = vunpack.c.l.b16 %v378
    %v2683 = vunpack.c.l.b16 %v379
    %v2684 = vunpack.c.l.b16 %v380
    %v2685 = vunpack.c.l.b16 %v381
    %v2686 = vunpack.c.l.b16 %v382
    %v2687 = vunpack.c.l.b16 %v383
    %v2688 = vunpack.c.l.b16 %v384
    %v2689 = vunpack.c.l.b16 %v385
    %v2690 = vunpack.c.l.b16 %v386
    %v2691 = vunpack.c.l.b16 %v387
    %v2692 = vunpack.c.l.b16 %v388
    %v2693 = vunpack.c.l.b16 %v389
    %v2694 = vunpack.c.l.b16 %v390
    %v2695 = vunpack.c.l.b16 %v391
    %v2696 = vunpack.c.l.b16 %v392
    %v2697 = vunpack.c.l.b16 %v393
    %v2698 = vunpack.c.l.b16 %v394
    %v2699 = vunpack.c.l.b16 %v395
    %v2700 = vunpack.c.l.b16 %v396
    %v2701 = vunpack.c.l.b16 %v397
    %v2702 = vunpack.c.l.b16 %v398
    %v2703 = vunpack.c.l.b16 %v399
    %v2704 = vunpack.c.l.b16 %v400
    %v2705 = vunpack.c.l.b16 %v401
    %v2706 = vunpack.c.l.b16 %v402
    %v2707 = vunpack.c.l.b16 %v403
    %v2708 = vunpack.c.l.b16 %v404
    %v2709 = vunpack.c.l.b16 %v405
    %v2710 = vunpack.c.l.b16 %v406
    %v2711 = vunpack.c.l.b16 %v407
    %v2712 = vunpack.c.l.b16 %v408
    %v2713 = vunpack.c.l.b16 %v409
    %v2714 = vunpack.c.l.b16 %v410
    %v2715 = vunpack.c.l.b16 %v411
    %v2716 = vunpack.c.l.b16 %v412
    %v2717 = vunpack.c.l.b16 %v413
    %v2718 = vunpack.c.l.b16 %v414
    %v2719 = vunpack.c.l.b16 %v415
    %v2720 = vunpack.c.l.b16 %v416
    %v2721 = vunpack.c.l.b16 %v417
    %v2722 = vunpack.c.l.b16 %v418
    %v2723 = vunpack.c.l.b16 %v419
    %v2724 = vunpack.c.l.b16 %v420
    %v2725 = vunpack.c.l.b16 %v421
    %v2726 = vunpack.c.l.b16 %v422
    %v2727 = vunpack.c.l.b16 %v423
    %v2728 = vunpack.c.l.b16 %v424
    %v2729 = vunpack.c.l.b16 %v425
    %v2730 = vunpack.c.l.b16 %v426
    %v2731 = vunpack.c.l.b16 %v427
    %v2732 = vunpack.c.l.b16 %v428
    %v2733 = vunpack.c.l.b16 %v429
    %v2734 = vunpack.c.l.b16 %v430
    %v2735 = vunpack.c.l.b16 %v431
    %v2736 = vunpack.c.l.b16 %v432
    %v2737 = vunpack.c.l.b16 %v433
    %v2738 = vunpack.c.l.b16 %v434
    %v2739 = vunpack.c.l.b16 %v435
    %v2740 = vunpack.c.l.b16 %v436
    %v2741 = vunpack.c.l.b16 %v437
    %v2742 = vunpack.c.l.b16 %v438
    %v2743 = vunpack.c.l.b16 %v439
    %v2744 = vpack.c.b16 %v2681, %v2680
    %v2745 = vpack.c.b16 %v2683, %v2682
    %v2746 = vpack.c.b16 %v2685, %v2684
    %v2747 = vpack.c.b16 %v2687, %v2686
    %v2748 = vpack.c.b16 %v2689, %v2688
    %v2749 = vpack.c.b16 %v2691, %v2690
    %v2750 = vpack.c.b16 %v2693, %v2692
    %v2751 = vpack.c.b16 %v2695, %v2694
    %v2752 = vpack.c.b16 %v2697, %v2696
    %v2753 = vpack.c.b16 %v2699, %v2698
    %v2754 = vpack.c.b16 %v2701, %v2700
    %v2755 = vpack.c.b16 %v2703, %v2702
    %v2756 = vpack.c.b16 %v2705, %v2704
    %v2757 = vpack.c.b16 %v2707, %v2706
    %v2758 = vpack.c.b16 %v2709, %v2708
    %v2759 = vpack.c.b16 %v2711, %v2710
    %v2760 = vpack.c.b16 %v2713, %v2712
    %v2761 = vpack.c.b16 %v2715, %v2714
    %v2762 = vpack.c.b16 %v2717, %v2716
    %v2763 = vpack.c.b16 %v2719, %v2718
    %v2764 = vpack.c.b16 %v2721, %v2720
    %v2765 = vpack.c.b16 %v2723, %v2722
    %v2766 = vpack.c.b16 %v2725, %v2724
    %v2767 = vpack.c.b16 %v2727, %v2726
    %v2768 = vpack.c.b16 %v2729, %v2728
    %v2769 = vpack.c.b16 %v2731, %v2730
    %v2770 = vpack.c.b16 %v2733, %v2732
    %v2771 = vpack.c.b16 %v2735, %v2734
    %v2772 = vpack.c.b16 %v2737, %v2736
    %v2773 = vpack.c.b16 %v2739, %v2738
    %v2774 = vpack.c.b16 %v2741, %v2740
    %v2775 = vpack.c.b16 %v2743, %v2742
    %2808 = vmatprep.subr.bf16.mxu0 0
    %2809 = vmatpush1.bf16.msra.mxu0 %v2744
    %2810 = vmatprep.subr.bf16.mxu0 0
    %2811 = vmatpush1.bf16.msra.mxu0 %v2745
    %2812 = vmatprep.subr.bf16.mxu0 0
    %2813 = vmatpush1.bf16.msra.mxu0 %v2746
    %2814 = vmatprep.subr.bf16.mxu0 0
    %2815 = vmatpush1.bf16.msra.mxu0 %v2747
    %2816 = vmatprep.subr.bf16.mxu0 0
    %2817 = vmatpush1.bf16.msra.mxu0 %v2748
    %2818 = vmatprep.subr.bf16.mxu0 0
    %2819 = vmatpush1.bf16.msra.mxu0 %v2749
    %2820 = vmatprep.subr.bf16.mxu0 0
    %2821 = vmatpush1.bf16.msra.mxu0 %v2750
    %2822 = vmatprep.subr.bf16.mxu0 0
    %2823 = vmatpush1.bf16.msra.mxu0 %v2751
    %2824 = vmatprep.subr.bf16.mxu0 0
    %2825 = vmatpush1.bf16.msra.mxu0 %v2752
    %2826 = vmatprep.subr.bf16.mxu0 0
    %2827 = vmatpush1.bf16.msra.mxu0 %v2753
    %2828 = vmatprep.subr.bf16.mxu0 0
    %2829 = vmatpush1.bf16.msra.mxu0 %v2754
    %2830 = vmatprep.subr.bf16.mxu0 0
    %2831 = vmatpush1.bf16.msra.mxu0 %v2755
    %2832 = vmatprep.subr.bf16.mxu0 0
    %2833 = vmatpush1.bf16.msra.mxu0 %v2756
    %2834 = vmatprep.subr.bf16.mxu0 0
    %2835 = vmatpush1.bf16.msra.mxu0 %v2757
    %2836 = vmatprep.subr.bf16.mxu0 0
    %2837 = vmatpush1.bf16.msra.mxu0 %v2758
    %2838 = vmatprep.subr.bf16.mxu0 0
    %2839 = vmatpush1.bf16.msra.mxu0 %v2759
    %2840 = vmatprep.mubr.bf16.mxu0 %v2609
    %2841 = vmatmul.mubr.bf16.gmra.mrb[0].mxu0 %v2608
    %v2842 = vpop.f32.mrb[0].mxu0
    %v2843 = vadd.f32 %v2615, %v2842
    %v2844 = vpop.f32.mrb[0].mxu0
    %v2845 = vpop.f32.mrb[0].mxu0
    %v2846 = vpop.f32.mrb[0].mxu0
    %2847 = vdwg.mxu0
    %2848 = vmatprep.subr.bf16.mxu0 0
    %2849 = vmatpush1.bf16.msra.mxu0 %v2760
    %2850 = vmatprep.subr.bf16.mxu0 0
    %2851 = vmatpush1.bf16.msra.mxu0 %v2761
    %2852 = vmatprep.subr.bf16.mxu0 0
    %2853 = vmatpush1.bf16.msra.mxu0 %v2762
    %2854 = vmatprep.subr.bf16.mxu0 0
    %2855 = vmatpush1.bf16.msra.mxu0 %v2763
    %2856 = vmatprep.subr.bf16.mxu0 0
    %2857 = vmatpush1.bf16.msra.mxu0 %v2764
    %2858 = vmatprep.subr.bf16.mxu0 0
    %2859 = vmatpush1.bf16.msra.mxu0 %v2765
    %2860 = vmatprep.subr.bf16.mxu0 0
    %2861 = vmatpush1.bf16.msra.mxu0 %v2766
    %2862 = vmatprep.subr.bf16.mxu0 0
    %2863 = vmatpush1.bf16.msra.mxu0 %v2767
    %2864 = vmatprep.subr.bf16.mxu0 0
    %2865 = vmatpush1.bf16.msra.mxu0 %v2768
    %2866 = vmatprep.subr.bf16.mxu0 0
    %2867 = vmatpush1.bf16.msra.mxu0 %v2769
    %2868 = vmatprep.subr.bf16.mxu0 0
    %2869 = vmatpush1.bf16.msra.mxu0 %v2770
    %2870 = vmatprep.subr.bf16.mxu0 0
    %2871 = vmatpush1.bf16.msra.mxu0 %v2771
    %2872 = vmatprep.subr.bf16.mxu0 0
    %2873 = vmatpush1.bf16.msra.mxu0 %v2772
    %2874 = vmatprep.subr.bf16.mxu0 0
    %2875 = vmatpush1.bf16.msra.mxu0 %v2773
    %2876 = vmatprep.subr.bf16.mxu0 0
    %2877 = vmatpush1.bf16.msra.mxu0 %v2774
    %2878 = vmatprep.subr.bf16.mxu0 0
    %2879 = vmatpush1.bf16.msra.mxu0 %v2775
    %2880 = vmatprep.mubr.bf16.mxu0 %v2611
    %2881 = vmatmul.mubr.bf16.gmra.mrb[0].mxu0 %v2610
    %v2882 = vpop.f32.mrb[0].mxu0
    %v2883 = vadd.f32 %v2843, %v2882
    %v2884 = vpop.f32.mrb[0].mxu0
    %v2885 = vpop.f32.mrb[0].mxu0
    %v2886 = vpop.f32.mrb[0].mxu0
    %2887 = vdwg.mxu0
    %2888 = vmax.xlane.f32.xlu0 %v2883
    %v2889 = vpop.xlane.xlu0 %2888
    %v2890 = vsub.f32 %v2883, %v2889
    %v2891 = vmul.f32 %v2890, 1.442695
    %v2892 = vpow.pop %v2891
    %2893 = vadd.xlane.f32.xlu0 %v2892
    %v2894 = vpop.xlane.xlu0 %2893
    %v2895 = vlog2.pop %v2894
    %v2896 = vmul.f32 %v2895, 0.6931472
    %v2897 = vsub.f32 %v2890, %v2896
    %2898 = vst [vmem:[%s2] sm:$0xff] %v2897
    // Predicated region
    $region18: #{baseline_ann_forward.1} parent=1 // pred_check
      _
    $region19: #{baseline_ann_forward.1} parent=1 // pred_check_branch
      %2900 = sbr.rel (0) target = $region21
    $region20: #{baseline_ann_forward.1} parent=1 // pred_region
      _
    $region21: #{baseline_ann_forward.1} parent=1 // pred_fallthru
      _
    // Predicated region
    $region22: #{baseline_ann_forward.1} parent=1 // pred_check
      _
    $region23: #{baseline_ann_forward.1} parent=1 // pred_check_branch
      %2902 = sbr.rel (0) target = $region25
    $region24: #{baseline_ann_forward.1} parent=1 // pred_region
      _
    $region25: #{baseline_ann_forward.1} parent=1 // pred_fallthru
      _
    %2903 = vsyncpa [#allocation3], 1
    %2904 = vsyncpa [#allocation5], 1

</llo_original>
